<compile_context>
chip_gen: v5e
topology: v5e:2x2
jax: 0.10.0
libtpu: 0.0.40
codegen_flags: <defaults>
</compile_context>

<pallas_src>
import functools

import jax
import jax.numpy as jnp
from jax import lax
from jax.experimental import pallas as pl
from jax.experimental.pallas import tpu as pltpu

EPS = 1e-5  # PyTorch BatchNorm1d default eps


# ---------------------------------------------------------------------------
# In-kernel helpers (f32 math)
# ---------------------------------------------------------------------------
def _bn1d(h):
    """BatchNorm1d training-mode normalization on one branch's (B, D)
    activation. Two-pass (centered) variance for numerical stability."""
    mean = jnp.mean(h, axis=0, keepdims=True)
    centered = h - mean
    var = jnp.mean(centered * centered, axis=0, keepdims=True)
    return centered * lax.rsqrt(var + EPS)


def _bn_affine_relu_bf16(h, gamma, beta):
    """Affine BN + ReLU, output stored as bf16 (fused cast)."""
    y = _bn1d(h) * gamma + beta
    return jnp.maximum(y, 0.0).astype(jnp.bfloat16)


# ---------------------------------------------------------------------------
# Fused kernel
# ---------------------------------------------------------------------------
def _fused_barlow_kernel(x1_ref, x2_ref, wbb_ref, w1_ref, g1_ref, b1_ref,
                         w2_ref, g2_ref, b2_ref, w3_ref, o_ref,
                         *, batch_size, lambd):
    # Weights are loaded once and reused for both branches.
    wbb = wbb_ref[...]
    w1 = w1_ref[...]
    g1 = g1_ref[...]
    b1 = b1_ref[...]
    w2 = w2_ref[...]
    g2 = g2_ref[...]
    b2 = b2_ref[...]
    w3 = w3_ref[...]

    def branch(x_ref):
        # Backbone stub: GAP folded into wbb. Cast to bf16 in VMEM.
        feat = jnp.dot(x_ref[...].astype(jnp.bfloat16), wbb,
                       preferred_element_type=jnp.float32)          # (B, F) f32
        # Projector: Linear -> BN -> ReLU, Linear -> BN -> ReLU, Linear.
        h = jnp.dot(feat.astype(jnp.bfloat16), w1,
                    preferred_element_type=jnp.float32)
        h = _bn_affine_relu_bf16(h, g1, b1)                          # bf16
        h = jnp.dot(h, w2, preferred_element_type=jnp.float32)
        h = _bn_affine_relu_bf16(h, g2, b2)                          # bf16
        z = jnp.dot(h, w3, preferred_element_type=jnp.float32)       # (B, D)
        # Final non-affine BatchNorm1d (self.bn).
        return _bn1d(z)

    z1n = branch(x1_ref)                                             # (B, D) f32
    z2n = branch(x2_ref)                                             # (B, D) f32

    # Fold 1/batch_size into the (B, D) operand instead of the (D, D) result,
    # and run the cross-correlation matmul in bf16 with f32 accumulation.
    z1b = (z1n * (1.0 / batch_size)).astype(jnp.bfloat16)
    z2b = z2n.astype(jnp.bfloat16)
    c = lax.dot_general(z1b, z2b, (((0,), (0,)), ((), ())),
                        preferred_element_type=jnp.float32)          # (D, D)

    # Barlow loss.
    #   on_diag  = sum((c_ii - 1)^2) = sum(c_ii^2) - 2*sum(c_ii) + D
    #   off_diag = sum(c^2) - sum(c_ii^2)
    d = c.shape[0]
    row = lax.broadcasted_iota(jnp.int32, (d, 1), 0)
    col = lax.broadcasted_iota(jnp.int32, (1, d), 1)
    eye = (row == col).astype(jnp.float32)                           # (D, D)
    diag_vec = jnp.sum(c * eye, axis=0, keepdims=True)               # (1, D)
    sum_sq = jnp.sum(c * c)
    diag_sum = jnp.sum(diag_vec)
    diag_sq = jnp.sum(diag_vec * diag_vec)
    on_diag = diag_sq - 2.0 * diag_sum + float(d)
    off_diag = sum_sq - diag_sq
    o_ref[0, 0] = on_diag + lambd * off_diag


# ---------------------------------------------------------------------------
# Wrapper
# ---------------------------------------------------------------------------
def _full_spec(shape):
    return pl.BlockSpec(shape, lambda: (0,) * len(shape))


def barlow_twins_forward(y1, y2, params, *, lambd, batch_size):
    B, C, H, W = y1.shape
    K = C * H * W
    # Reshape of contiguous NCHW -> (B, K) is a free view; no concat, no cast.
    x1 = y1.reshape(B, K)
    x2 = y2.reshape(B, K)

    wbb = params["w_bb_exp"]
    w1, g1, b1 = params["w1"], params["g1"], params["b1"]
    w2, g2, b2 = params["w2"], params["g2"], params["b2"]
    w3 = params["w3"]
    F, H1, H2, D = wbb.shape[1], w1.shape[1], w2.shape[1], w3.shape[1]

    kernel = functools.partial(_fused_barlow_kernel,
                               batch_size=float(batch_size),
                               lambd=float(lambd))

    # Advisory cost estimate for the XLA scheduler.
    mm_flops = 2 * 2 * B * (K * F + F * H1 + H1 * H2 + H2 * D)  # both branches
    corr_flops = 2 * B * D * D
    bytes_accessed = (2 * B * K * 4                                   # x1, x2 f32
                      + 2 * (K * F + F * H1 + H1 * H2 + H2 * D)       # bf16 weights
                      + 4 * 2 * (H1 + H2)                             # gammas/betas
                      + 4)                                            # loss
    cost = pl.CostEstimate(flops=mm_flops + corr_flops,
                           transcendentals=0,
                           bytes_accessed=bytes_accessed)

    loss = pl.pallas_call(
        kernel,
        out_shape=jax.ShapeDtypeStruct((1, 1), jnp.float32),
        in_specs=[_full_spec((B, K)),                     # view 1
                  _full_spec((B, K)),                     # view 2
                  _full_spec((K, F)),                     # backbone weight
                  _full_spec((F, H1)),                    # w1
                  _full_spec((1, H1)), _full_spec((1, H1)),   # g1, b1
                  _full_spec((H1, H2)),                   # w2
                  _full_spec((1, H2)), _full_spec((1, H2)),   # g2, b2
                  _full_spec((H2, D))],                   # w3
        out_specs=pl.BlockSpec(memory_space=pltpu.MemorySpace.SMEM),
        compiler_params=pltpu.CompilerParams(
            vmem_limit_bytes=32 * 1024 * 1024),
        cost_estimate=cost,
    )(x1, x2, wbb, w1, g1, b1, w2, g2, b2, w3)
    return loss[0, 0]


# ---------------------------------------------------------------------------
# Main
# ---------------------------------------------------------------------------
if __name__ == "__main__":
    # Toy shapes: batch=8, channels=4, spatial=16x16.
    # All feature dims are 128 so every tile is lane-dense; B=8 is sublane-dense.
    B, C, H, W = 8, 4, 16, 16
    F, H1, H2, D = 128, 128, 128, 128
    LAMBD = 0.0051

    key = jax.random.PRNGKey(0)
    k = jax.random.split(key, 6)

    w_bb = jax.random.normal(k[0], (C, F), jnp.float32) * 0.1
    # Fold the global-average-pool (mean over H*W) into the backbone stub weight
    # so GAP + Linear becomes a single lane-dense matmul.
    w_bb_exp = (jnp.repeat(w_bb, H * W, axis=0) / float(H * W)).astype(jnp.bfloat16)

    params = {
        "w_bb_exp": w_bb_exp,
        "w1": (jax.random.normal(k[1], (F, H1), jnp.float32) * 0.1
               ).astype(jnp.bfloat16),
        "g1": jnp.ones((1, H1), jnp.float32),
        "b1": jnp.zeros((1, H1), jnp.float32),
        "w2": (jax.random.normal(k[2], (H1, H2), jnp.float32) * 0.1
               ).astype(jnp.bfloat16),
        "g2": jnp.ones((1, H2), jnp.float32),
        "b2": jnp.zeros((1, H2), jnp.float32),
        "w3": (jax.random.normal(k[3], (H2, D), jnp.float32) * 0.1
               ).astype(jnp.bfloat16),
    }

    y1 = jax.random.normal(k[4], (B, C, H, W), jnp.float32)
    y2 = jax.random.normal(k[5], (B, C, H, W), jnp.float32)

    fwd = jax.jit(functools.partial(barlow_twins_forward,
                                    lambd=LAMBD, batch_size=B))
    loss = fwd(y1, y2, params)
    jax.block_until_ready(loss)
    print("KERNEL_OK")
</pallas_src>

<mosaic_0001>
module attributes {stable_mosaic.version = 11 : i64} {
  func.func @_fused_barlow_kernel(%arg0: memref<8x1024xf32, #tpu.memory_space<vmem>>, %arg1: memref<8x1024xf32, #tpu.memory_space<vmem>>, %arg2: memref<1024x128xbf16, #tpu.memory_space<vmem>>, %arg3: memref<128x128xbf16, #tpu.memory_space<vmem>>, %arg4: memref<1x128xf32, #tpu.memory_space<vmem>>, %arg5: memref<1x128xf32, #tpu.memory_space<vmem>>, %arg6: memref<128x128xbf16, #tpu.memory_space<vmem>>, %arg7: memref<1x128xf32, #tpu.memory_space<vmem>>, %arg8: memref<1x128xf32, #tpu.memory_space<vmem>>, %arg9: memref<128x128xbf16, #tpu.memory_space<vmem>>, %arg10: memref<1x1xf32, #tpu.memory_space<smem>>) attributes {dimension_semantics = [], scalar_prefetch = 0 : i64, scratch_operands = 0 : i64, tpu.core_type = #tpu.core_type<tc>} {
    %c0 = arith.constant 0 : index
    %c0_0 = arith.constant 0 : index
    %0 = vector.load %arg2[%c0, %c0_0] : memref<1024x128xbf16, #tpu.memory_space<vmem>>, vector<1024x128xbf16>
    %c0_1 = arith.constant 0 : index
    %c0_2 = arith.constant 0 : index
    %1 = vector.load %arg3[%c0_1, %c0_2] : memref<128x128xbf16, #tpu.memory_space<vmem>>, vector<128x128xbf16>
    %c0_3 = arith.constant 0 : index
    %c0_4 = arith.constant 0 : index
    %2 = vector.load %arg4[%c0_3, %c0_4] : memref<1x128xf32, #tpu.memory_space<vmem>>, vector<1x128xf32>
    %c0_5 = arith.constant 0 : index
    %c0_6 = arith.constant 0 : index
    %3 = vector.load %arg5[%c0_5, %c0_6] : memref<1x128xf32, #tpu.memory_space<vmem>>, vector<1x128xf32>
    %c0_7 = arith.constant 0 : index
    %c0_8 = arith.constant 0 : index
    %4 = vector.load %arg6[%c0_7, %c0_8] : memref<128x128xbf16, #tpu.memory_space<vmem>>, vector<128x128xbf16>
    %c0_9 = arith.constant 0 : index
    %c0_10 = arith.constant 0 : index
    %5 = vector.load %arg7[%c0_9, %c0_10] : memref<1x128xf32, #tpu.memory_space<vmem>>, vector<1x128xf32>
    %c0_11 = arith.constant 0 : index
    %c0_12 = arith.constant 0 : index
    %6 = vector.load %arg8[%c0_11, %c0_12] : memref<1x128xf32, #tpu.memory_space<vmem>>, vector<1x128xf32>
    %c0_13 = arith.constant 0 : index
    %c0_14 = arith.constant 0 : index
    %7 = vector.load %arg9[%c0_13, %c0_14] : memref<128x128xbf16, #tpu.memory_space<vmem>>, vector<128x128xbf16>
    %c0_15 = arith.constant 0 : index
    %c0_16 = arith.constant 0 : index
    %8 = vector.load %arg0[%c0_15, %c0_16] : memref<8x1024xf32, #tpu.memory_space<vmem>>, vector<8x1024xf32>
    %9 = arith.truncf %8 : vector<8x1024xf32> to vector<8x1024xbf16>
    %cst = arith.constant dense<0.000000e+00> : vector<8x128xf32>
    %10 = tpu.matmul %9, %0, %cst {dimension_numbers = #tpu.dot_dimension_numbers<[1], [0], [0], [1], [0, 0, 1, 1], [], []>} : vector<8x1024xbf16>, vector<1024x128xbf16>, vector<8x128xf32> -> vector<8x128xf32>
    %11 = arith.truncf %10 : vector<8x128xf32> to vector<8x128xbf16>
    %cst_17 = arith.constant dense<0.000000e+00> : vector<8x128xf32>
    %12 = tpu.matmul %11, %1, %cst_17 {dimension_numbers = #tpu.dot_dimension_numbers<[1], [0], [0], [1], [0, 0, 1, 1], [], []>} : vector<8x128xbf16>, vector<128x128xbf16>, vector<8x128xf32> -> vector<8x128xf32>
    %cst_18 = arith.constant dense<0.000000e+00> : vector<128xf32>
    %13 = vector.multi_reduction <add>, %12, %cst_18 [0] : vector<8x128xf32> to vector<128xf32>
    %14 = vector.shape_cast %13 : vector<128xf32> to vector<1x128xf32>
    %cst_19 = arith.constant 8.000000e+00 : f32
    %15 = vector.broadcast %cst_19 : f32 to vector<1x128xf32>
    %16 = arith.divf %14, %15 : vector<1x128xf32>
    %17 = vector.broadcast %16 : vector<1x128xf32> to vector<8x128xf32>
    %18 = arith.subf %12, %17 : vector<8x128xf32>
    %19 = arith.mulf %18, %18 : vector<8x128xf32>
    %cst_20 = arith.constant dense<0.000000e+00> : vector<128xf32>
    %20 = vector.multi_reduction <add>, %19, %cst_20 [0] : vector<8x128xf32> to vector<128xf32>
    %21 = vector.shape_cast %20 : vector<128xf32> to vector<1x128xf32>
    %cst_21 = arith.constant 8.000000e+00 : f32
    %22 = vector.broadcast %cst_21 : f32 to vector<1x128xf32>
    %23 = arith.divf %21, %22 : vector<1x128xf32>
    %cst_22 = arith.constant 9.99999974E-6 : f32
    %24 = vector.broadcast %cst_22 : f32 to vector<1x128xf32>
    %25 = arith.addf %23, %24 : vector<1x128xf32>
    %26 = math.rsqrt %25 : vector<1x128xf32>
    %27 = vector.broadcast %26 : vector<1x128xf32> to vector<8x128xf32>
    %28 = arith.mulf %18, %27 : vector<8x128xf32>
    %29 = vector.broadcast %2 : vector<1x128xf32> to vector<8x128xf32>
    %30 = arith.mulf %28, %29 : vector<8x128xf32>
    %31 = vector.broadcast %3 : vector<1x128xf32> to vector<8x128xf32>
    %32 = arith.addf %30, %31 : vector<8x128xf32>
    %cst_23 = arith.constant 0.000000e+00 : f32
    %33 = vector.broadcast %cst_23 : f32 to vector<8x128xf32>
    %34 = arith.maximumf %32, %33 : vector<8x128xf32>
    %35 = arith.truncf %34 : vector<8x128xf32> to vector<8x128xbf16>
    %cst_24 = arith.constant dense<0.000000e+00> : vector<8x128xf32>
    %36 = tpu.matmul %35, %4, %cst_24 {dimension_numbers = #tpu.dot_dimension_numbers<[1], [0], [0], [1], [0, 0, 1, 1], [], []>} : vector<8x128xbf16>, vector<128x128xbf16>, vector<8x128xf32> -> vector<8x128xf32>
    %cst_25 = arith.constant dense<0.000000e+00> : vector<128xf32>
    %37 = vector.multi_reduction <add>, %36, %cst_25 [0] : vector<8x128xf32> to vector<128xf32>
    %38 = vector.shape_cast %37 : vector<128xf32> to vector<1x128xf32>
    %cst_26 = arith.constant 8.000000e+00 : f32
    %39 = vector.broadcast %cst_26 : f32 to vector<1x128xf32>
    %40 = arith.divf %38, %39 : vector<1x128xf32>
    %41 = vector.broadcast %40 : vector<1x128xf32> to vector<8x128xf32>
    %42 = arith.subf %36, %41 : vector<8x128xf32>
    %43 = arith.mulf %42, %42 : vector<8x128xf32>
    %cst_27 = arith.constant dense<0.000000e+00> : vector<128xf32>
    %44 = vector.multi_reduction <add>, %43, %cst_27 [0] : vector<8x128xf32> to vector<128xf32>
    %45 = vector.shape_cast %44 : vector<128xf32> to vector<1x128xf32>
    %cst_28 = arith.constant 8.000000e+00 : f32
    %46 = vector.broadcast %cst_28 : f32 to vector<1x128xf32>
    %47 = arith.divf %45, %46 : vector<1x128xf32>
    %cst_29 = arith.constant 9.99999974E-6 : f32
    %48 = vector.broadcast %cst_29 : f32 to vector<1x128xf32>
    %49 = arith.addf %47, %48 : vector<1x128xf32>
    %50 = math.rsqrt %49 : vector<1x128xf32>
    %51 = vector.broadcast %50 : vector<1x128xf32> to vector<8x128xf32>
    %52 = arith.mulf %42, %51 : vector<8x128xf32>
    %53 = vector.broadcast %5 : vector<1x128xf32> to vector<8x128xf32>
    %54 = arith.mulf %52, %53 : vector<8x128xf32>
    %55 = vector.broadcast %6 : vector<1x128xf32> to vector<8x128xf32>
    %56 = arith.addf %54, %55 : vector<8x128xf32>
    %cst_30 = arith.constant 0.000000e+00 : f32
    %57 = vector.broadcast %cst_30 : f32 to vector<8x128xf32>
    %58 = arith.maximumf %56, %57 : vector<8x128xf32>
    %59 = arith.truncf %58 : vector<8x128xf32> to vector<8x128xbf16>
    %cst_31 = arith.constant dense<0.000000e+00> : vector<8x128xf32>
    %60 = tpu.matmul %59, %7, %cst_31 {dimension_numbers = #tpu.dot_dimension_numbers<[1], [0], [0], [1], [0, 0, 1, 1], [], []>} : vector<8x128xbf16>, vector<128x128xbf16>, vector<8x128xf32> -> vector<8x128xf32>
    %cst_32 = arith.constant dense<0.000000e+00> : vector<128xf32>
    %61 = vector.multi_reduction <add>, %60, %cst_32 [0] : vector<8x128xf32> to vector<128xf32>
    %62 = vector.shape_cast %61 : vector<128xf32> to vector<1x128xf32>
    %cst_33 = arith.constant 8.000000e+00 : f32
    %63 = vector.broadcast %cst_33 : f32 to vector<1x128xf32>
    %64 = arith.divf %62, %63 : vector<1x128xf32>
    %65 = vector.broadcast %64 : vector<1x128xf32> to vector<8x128xf32>
    %66 = arith.subf %60, %65 : vector<8x128xf32>
    %67 = arith.mulf %66, %66 : vector<8x128xf32>
    %cst_34 = arith.constant dense<0.000000e+00> : vector<128xf32>
    %68 = vector.multi_reduction <add>, %67, %cst_34 [0] : vector<8x128xf32> to vector<128xf32>
    %69 = vector.shape_cast %68 : vector<128xf32> to vector<1x128xf32>
    %cst_35 = arith.constant 8.000000e+00 : f32
    %70 = vector.broadcast %cst_35 : f32 to vector<1x128xf32>
    %71 = arith.divf %69, %70 : vector<1x128xf32>
    %cst_36 = arith.constant 9.99999974E-6 : f32
    %72 = vector.broadcast %cst_36 : f32 to vector<1x128xf32>
    %73 = arith.addf %71, %72 : vector<1x128xf32>
    %74 = math.rsqrt %73 : vector<1x128xf32>
    %75 = vector.broadcast %74 : vector<1x128xf32> to vector<8x128xf32>
    %76 = arith.mulf %66, %75 : vector<8x128xf32>
    %c0_37 = arith.constant 0 : index
    %c0_38 = arith.constant 0 : index
    %77 = vector.load %arg1[%c0_37, %c0_38] : memref<8x1024xf32, #tpu.memory_space<vmem>>, vector<8x1024xf32>
    %78 = arith.truncf %77 : vector<8x1024xf32> to vector<8x1024xbf16>
    %cst_39 = arith.constant dense<0.000000e+00> : vector<8x128xf32>
    %79 = tpu.matmul %78, %0, %cst_39 {dimension_numbers = #tpu.dot_dimension_numbers<[1], [0], [0], [1], [0, 0, 1, 1], [], []>} : vector<8x1024xbf16>, vector<1024x128xbf16>, vector<8x128xf32> -> vector<8x128xf32>
    %80 = arith.truncf %79 : vector<8x128xf32> to vector<8x128xbf16>
    %cst_40 = arith.constant dense<0.000000e+00> : vector<8x128xf32>
    %81 = tpu.matmul %80, %1, %cst_40 {dimension_numbers = #tpu.dot_dimension_numbers<[1], [0], [0], [1], [0, 0, 1, 1], [], []>} : vector<8x128xbf16>, vector<128x128xbf16>, vector<8x128xf32> -> vector<8x128xf32>
    %cst_41 = arith.constant dense<0.000000e+00> : vector<128xf32>
    %82 = vector.multi_reduction <add>, %81, %cst_41 [0] : vector<8x128xf32> to vector<128xf32>
    %83 = vector.shape_cast %82 : vector<128xf32> to vector<1x128xf32>
    %cst_42 = arith.constant 8.000000e+00 : f32
    %84 = vector.broadcast %cst_42 : f32 to vector<1x128xf32>
    %85 = arith.divf %83, %84 : vector<1x128xf32>
    %86 = vector.broadcast %85 : vector<1x128xf32> to vector<8x128xf32>
    %87 = arith.subf %81, %86 : vector<8x128xf32>
    %88 = arith.mulf %87, %87 : vector<8x128xf32>
    %cst_43 = arith.constant dense<0.000000e+00> : vector<128xf32>
    %89 = vector.multi_reduction <add>, %88, %cst_43 [0] : vector<8x128xf32> to vector<128xf32>
    %90 = vector.shape_cast %89 : vector<128xf32> to vector<1x128xf32>
    %cst_44 = arith.constant 8.000000e+00 : f32
    %91 = vector.broadcast %cst_44 : f32 to vector<1x128xf32>
    %92 = arith.divf %90, %91 : vector<1x128xf32>
    %cst_45 = arith.constant 9.99999974E-6 : f32
    %93 = vector.broadcast %cst_45 : f32 to vector<1x128xf32>
    %94 = arith.addf %92, %93 : vector<1x128xf32>
    %95 = math.rsqrt %94 : vector<1x128xf32>
    %96 = vector.broadcast %95 : vector<1x128xf32> to vector<8x128xf32>
    %97 = arith.mulf %87, %96 : vector<8x128xf32>
    %98 = vector.broadcast %2 : vector<1x128xf32> to vector<8x128xf32>
    %99 = arith.mulf %97, %98 : vector<8x128xf32>
    %100 = vector.broadcast %3 : vector<1x128xf32> to vector<8x128xf32>
    %101 = arith.addf %99, %100 : vector<8x128xf32>
    %cst_46 = arith.constant 0.000000e+00 : f32
    %102 = vector.broadcast %cst_46 : f32 to vector<8x128xf32>
    %103 = arith.maximumf %101, %102 : vector<8x128xf32>
    %104 = arith.truncf %103 : vector<8x128xf32> to vector<8x128xbf16>
    %cst_47 = arith.constant dense<0.000000e+00> : vector<8x128xf32>
    %105 = tpu.matmul %104, %4, %cst_47 {dimension_numbers = #tpu.dot_dimension_numbers<[1], [0], [0], [1], [0, 0, 1, 1], [], []>} : vector<8x128xbf16>, vector<128x128xbf16>, vector<8x128xf32> -> vector<8x128xf32>
    %cst_48 = arith.constant dense<0.000000e+00> : vector<128xf32>
    %106 = vector.multi_reduction <add>, %105, %cst_48 [0] : vector<8x128xf32> to vector<128xf32>
    %107 = vector.shape_cast %106 : vector<128xf32> to vector<1x128xf32>
    %cst_49 = arith.constant 8.000000e+00 : f32
    %108 = vector.broadcast %cst_49 : f32 to vector<1x128xf32>
    %109 = arith.divf %107, %108 : vector<1x128xf32>
    %110 = vector.broadcast %109 : vector<1x128xf32> to vector<8x128xf32>
    %111 = arith.subf %105, %110 : vector<8x128xf32>
    %112 = arith.mulf %111, %111 : vector<8x128xf32>
    %cst_50 = arith.constant dense<0.000000e+00> : vector<128xf32>
    %113 = vector.multi_reduction <add>, %112, %cst_50 [0] : vector<8x128xf32> to vector<128xf32>
    %114 = vector.shape_cast %113 : vector<128xf32> to vector<1x128xf32>
    %cst_51 = arith.constant 8.000000e+00 : f32
    %115 = vector.broadcast %cst_51 : f32 to vector<1x128xf32>
    %116 = arith.divf %114, %115 : vector<1x128xf32>
    %cst_52 = arith.constant 9.99999974E-6 : f32
    %117 = vector.broadcast %cst_52 : f32 to vector<1x128xf32>
    %118 = arith.addf %116, %117 : vector<1x128xf32>
    %119 = math.rsqrt %118 : vector<1x128xf32>
    %120 = vector.broadcast %119 : vector<1x128xf32> to vector<8x128xf32>
    %121 = arith.mulf %111, %120 : vector<8x128xf32>
    %122 = vector.broadcast %5 : vector<1x128xf32> to vector<8x128xf32>
    %123 = arith.mulf %121, %122 : vector<8x128xf32>
    %124 = vector.broadcast %6 : vector<1x128xf32> to vector<8x128xf32>
    %125 = arith.addf %123, %124 : vector<8x128xf32>
    %cst_53 = arith.constant 0.000000e+00 : f32
    %126 = vector.broadcast %cst_53 : f32 to vector<8x128xf32>
    %127 = arith.maximumf %125, %126 : vector<8x128xf32>
    %128 = arith.truncf %127 : vector<8x128xf32> to vector<8x128xbf16>
    %cst_54 = arith.constant dense<0.000000e+00> : vector<8x128xf32>
    %129 = tpu.matmul %128, %7, %cst_54 {dimension_numbers = #tpu.dot_dimension_numbers<[1], [0], [0], [1], [0, 0, 1, 1], [], []>} : vector<8x128xbf16>, vector<128x128xbf16>, vector<8x128xf32> -> vector<8x128xf32>
    %cst_55 = arith.constant dense<0.000000e+00> : vector<128xf32>
    %130 = vector.multi_reduction <add>, %129, %cst_55 [0] : vector<8x128xf32> to vector<128xf32>
    %131 = vector.shape_cast %130 : vector<128xf32> to vector<1x128xf32>
    %cst_56 = arith.constant 8.000000e+00 : f32
    %132 = vector.broadcast %cst_56 : f32 to vector<1x128xf32>
    %133 = arith.divf %131, %132 : vector<1x128xf32>
    %134 = vector.broadcast %133 : vector<1x128xf32> to vector<8x128xf32>
    %135 = arith.subf %129, %134 : vector<8x128xf32>
    %136 = arith.mulf %135, %135 : vector<8x128xf32>
    %cst_57 = arith.constant dense<0.000000e+00> : vector<128xf32>
    %137 = vector.multi_reduction <add>, %136, %cst_57 [0] : vector<8x128xf32> to vector<128xf32>
    %138 = vector.shape_cast %137 : vector<128xf32> to vector<1x128xf32>
    %cst_58 = arith.constant 8.000000e+00 : f32
    %139 = vector.broadcast %cst_58 : f32 to vector<1x128xf32>
    %140 = arith.divf %138, %139 : vector<1x128xf32>
    %cst_59 = arith.constant 9.99999974E-6 : f32
    %141 = vector.broadcast %cst_59 : f32 to vector<1x128xf32>
    %142 = arith.addf %140, %141 : vector<1x128xf32>
    %143 = math.rsqrt %142 : vector<1x128xf32>
    %144 = vector.broadcast %143 : vector<1x128xf32> to vector<8x128xf32>
    %145 = arith.mulf %135, %144 : vector<8x128xf32>
    %cst_60 = arith.constant 1.250000e-01 : f32
    %146 = vector.broadcast %cst_60 : f32 to vector<8x128xf32>
    %147 = arith.mulf %76, %146 : vector<8x128xf32>
    %148 = arith.truncf %147 : vector<8x128xf32> to vector<8x128xbf16>
    %149 = arith.truncf %145 : vector<8x128xf32> to vector<8x128xbf16>
    %cst_61 = arith.constant dense<0.000000e+00> : vector<128x128xf32>
    %150 = tpu.matmul %148, %149, %cst_61 {dimension_numbers = #tpu.dot_dimension_numbers<[0], [0], [1], [1], [0, 1, 1, 1], [], []>} : vector<8x128xbf16>, vector<8x128xbf16>, vector<128x128xf32> -> vector<128x128xf32>
    %151 = tpu.iota {dimensions = array<i32: 0>} : vector<128x1xi32>
    %152 = tpu.iota {dimensions = array<i32: 1>} : vector<1x128xi32>
    %153 = vector.broadcast %151 : vector<128x1xi32> to vector<128x128xi32>
    %154 = vector.broadcast %152 : vector<1x128xi32> to vector<128x128xi32>
    %155 = arith.cmpi eq, %153, %154 : vector<128x128xi32>
    %156 = arith.extui %155 : vector<128x128xi1> to vector<128x128xi32>
    %157 = arith.sitofp %156 : vector<128x128xi32> to vector<128x128xf32>
    %158 = arith.mulf %150, %157 : vector<128x128xf32>
    %cst_62 = arith.constant dense<0.000000e+00> : vector<128xf32>
    %159 = vector.multi_reduction <add>, %158, %cst_62 [0] : vector<128x128xf32> to vector<128xf32>
    %160 = vector.shape_cast %159 : vector<128xf32> to vector<1x128xf32>
    %161 = arith.mulf %150, %150 : vector<128x128xf32>
    %162 = vector.shape_cast %161 : vector<128x128xf32> to vector<1x128x128xf32>
    %cst_63 = arith.constant dense<0.000000e+00> : vector<1xf32>
    %163 = vector.multi_reduction <add>, %162, %cst_63 [1, 2] : vector<1x128x128xf32> to vector<1xf32>
    %164 = vector.shape_cast %163 : vector<1xf32> to vector<1x1x1xf32>
    %165 = vector.extract %164[0, 0, 0] : f32 from vector<1x1x1xf32>
    %166 = vector.shape_cast %160 : vector<1x128xf32> to vector<1x1x128xf32>
    %cst_64 = arith.constant dense<0.000000e+00> : vector<1xf32>
    %167 = vector.multi_reduction <add>, %166, %cst_64 [1, 2] : vector<1x1x128xf32> to vector<1xf32>
    %168 = vector.shape_cast %167 : vector<1xf32> to vector<1x1x1xf32>
    %169 = vector.extract %168[0, 0, 0] : f32 from vector<1x1x1xf32>
    %170 = arith.mulf %160, %160 : vector<1x128xf32>
    %171 = vector.shape_cast %170 : vector<1x128xf32> to vector<1x1x128xf32>
    %cst_65 = arith.constant dense<0.000000e+00> : vector<1xf32>
    %172 = vector.multi_reduction <add>, %171, %cst_65 [1, 2] : vector<1x1x128xf32> to vector<1xf32>
    %173 = vector.shape_cast %172 : vector<1xf32> to vector<1x1x1xf32>
    %174 = vector.extract %173[0, 0, 0] : f32 from vector<1x1x1xf32>
    %cst_66 = arith.constant 2.000000e+00 : f32
    %175 = arith.mulf %cst_66, %169 : f32
    %176 = arith.subf %174, %175 : f32
    %cst_67 = arith.constant 1.280000e+02 : f32
    %177 = arith.addf %176, %cst_67 : f32
    %178 = arith.subf %165, %174 : f32
    %cst_68 = arith.constant 5.100000e-03 : f32
    %179 = arith.mulf %cst_68, %178 : f32
    %180 = arith.addf %177, %179 : f32
    %c0_69 = arith.constant 0 : index
    %c0_70 = arith.constant 0 : index
    %181 = memref.load %arg10[%c0_69, %c0_70] : memref<1x1xf32, #tpu.memory_space<smem>>
    memref.store %180, %arg10[%c0_69, %c0_70] : memref<1x1xf32, #tpu.memory_space<smem>>
    return
  }
}

</mosaic_0001>

<llo_original>
// kernel: barlow_twins_forward.1
$region0: #{barlow_twins_forward.1}
  #allocation0 [shape = 'u32[]', space=smem, size = 0x4, offset = 0x4, fixed_abs, tag = 'smem constant byte address 0x4 - core index']
  #allocation1 [shape = 'u32[72,128]{1,0:T(1,128)}', space=vmem, size = 0x9000, scoped, tag = 'internal scratch']
  %s0 = inlined_call_operand.vmem [shape: f32[8,1024], index: 0, kind: input, shape index: {}]
  %s1 = inlined_call_operand.vmem [shape: f32[8,1024], index: 1, kind: input, shape index: {}]
  %s2 = inlined_call_operand.vmem [shape: bf16[1024,128], index: 2, kind: input, shape index: {}]
  %s3 = inlined_call_operand.vmem [shape: bf16[128,128], index: 3, kind: input, shape index: {}]
  %s4 = inlined_call_operand.hbm [shape: f32[1,128], index: 4, kind: input, shape index: {}]
  %s5 = inlined_call_operand.hbm [shape: f32[1,128], index: 5, kind: input, shape index: {}]
  %s6 = inlined_call_operand.vmem [shape: bf16[128,128], index: 6, kind: input, shape index: {}]
  %s7 = inlined_call_operand.hbm [shape: f32[1,128], index: 7, kind: input, shape index: {}]
  %s8 = inlined_call_operand.hbm [shape: f32[1,128], index: 8, kind: input, shape index: {}]
  %s9 = inlined_call_operand.hbm [shape: bf16[128,128], index: 9, kind: input, shape index: {}]
  %s10 = inlined_call_operand.hbm [shape: f32[1,1], index: 10, kind: output, shape index: {}]
  %s11 = sld [smem:[#allocation0]]
  $region70: #{barlow_twins_forward.1} parent=0
    _
  %s13 = ssub.s32 1, %s11
  %s14 = scalar_select 0, %s13, %s11
  $region1: #{barlow_twins_forward.1} parent=0
    #allocation2 [shape = 'u8[512]{0}', space=vmem, size = 0x400, scoped, tag = 'input window, operand 4, single buffered']
    #allocation3 [shape = 's32[1]{0}', space=sflag, size = 0x4, scoped, tag = 'scoped memory for barlow_twins_forward.1']
    #allocation4 [shape = 's32[1]{0}', space=sflag, size = 0x4, scoped, tag = 'scoped memory for barlow_twins_forward.1']
    #allocation5 [shape = 'u8[512]{0}', space=vmem, size = 0x400, scoped, tag = 'input window, operand 5, single buffered']
    #allocation6 [shape = 's32[1]{0}', space=sflag, size = 0x4, scoped, tag = 'scoped memory for barlow_twins_forward.1']
    #allocation7 [shape = 'u8[512]{0}', space=vmem, size = 0x400, scoped, tag = 'input window, operand 7, single buffered']
    #allocation8 [shape = 'u8[512]{0}', space=vmem, size = 0x400, scoped, tag = 'input window, operand 8, single buffered']
    #allocation9 [shape = 's32[1]{0}', space=sflag, size = 0x4, scoped, tag = 'scoped memory for barlow_twins_forward.1']
    #allocation10 [shape = 'u8[32768]{0}', space=vmem, size = 0x8000, scoped, tag = 'input window, operand 9, single buffered']
    #allocation11 [shape = 'u8[512]{0}', space=smem, size = 0x200, scoped, tag = 'output window, operand 0, single buffered']
    %15 = vsyncpa [#allocation3], 0
    %16 = vsyncpa [#allocation6], 0
    %17 = vsyncpa [#allocation9], 0
    %18 = vsyncpa [#allocation4], 0
    // Predicated region
    $region2: #{barlow_twins_forward.1} parent=1 // pred_check
      _
    $region3: #{barlow_twins_forward.1} parent=1 // pred_check_branch
      %20 = sbr.rel (0) target = $region5
    $region4: #{barlow_twins_forward.1} parent=1 // pred_region
      _
    $region5: #{barlow_twins_forward.1} parent=1 // pred_fallthru
      _
    // Predicated region
    $region6: #{barlow_twins_forward.1} parent=1 // pred_check
      _
    $region7: #{barlow_twins_forward.1} parent=1 // pred_check_branch
      %22 = sbr.rel (0) target = $region9
    $region8: #{barlow_twins_forward.1} parent=1 // pred_region
      _
    $region9: #{barlow_twins_forward.1} parent=1 // pred_fallthru
      _
    // Predicated region
    $region10: #{barlow_twins_forward.1} parent=1 // pred_check
      _
    $region11: #{barlow_twins_forward.1} parent=1 // pred_check_branch
      %24 = sbr.rel (0) target = $region13
    $region12: #{barlow_twins_forward.1} parent=1 // pred_region
      _
    $region13: #{barlow_twins_forward.1} parent=1 // pred_fallthru
      _
    // Predicated region
    $region14: #{barlow_twins_forward.1} parent=1 // pred_check
      _
    $region15: #{barlow_twins_forward.1} parent=1 // pred_check_branch
      %26 = sbr.rel (0) target = $region17
    $region16: #{barlow_twins_forward.1} parent=1 // pred_region
      _
    $region17: #{barlow_twins_forward.1} parent=1 // pred_fallthru
      _
    // Predicated region
    $region18: #{barlow_twins_forward.1} parent=1 // pred_check
      _
    $region19: #{barlow_twins_forward.1} parent=1 // pred_check_branch
      %28 = sbr.rel (0) target = $region21
    $region20: #{barlow_twins_forward.1} parent=1 // pred_region
      %30 = vsyncadd [#allocation3], 0
      %s32 = sshll.u32 %s4, 4
      %s33 = int_to_ptr.hbm [resolvable:$true] %s32
      %s34 = sshll.u32 [#allocation2], 4
      %s35 = int_to_ptr.vmem [resolvable:$true] %s34
      %37 = dma.hbm_to_vmem [thread:$0]  %s33, 16, %s35, [#allocation3]
    $region21: #{barlow_twins_forward.1} parent=1 // pred_fallthru
      _
    // Predicated region
    $region22: #{barlow_twins_forward.1} parent=1 // pred_check
      _
    $region23: #{barlow_twins_forward.1} parent=1 // pred_check_branch
      %39 = sbr.rel (0) target = $region25
    $region24: #{barlow_twins_forward.1} parent=1 // pred_region
      %41 = vsyncadd [#allocation6], 0
      %s43 = sshll.u32 %s5, 4
      %s44 = int_to_ptr.hbm [resolvable:$true] %s43
      %s45 = sshll.u32 [#allocation5], 4
      %s46 = int_to_ptr.vmem [resolvable:$true] %s45
      %48 = dma.hbm_to_vmem [thread:$0]  %s44, 16, %s46, [#allocation6]
    $region25: #{barlow_twins_forward.1} parent=1 // pred_fallthru
      _
    // Predicated region
    $region26: #{barlow_twins_forward.1} parent=1 // pred_check
      _
    $region27: #{barlow_twins_forward.1} parent=1 // pred_check_branch
      %50 = sbr.rel (0) target = $region29
    $region28: #{barlow_twins_forward.1} parent=1 // pred_region
      _
    $region29: #{barlow_twins_forward.1} parent=1 // pred_fallthru
      _
    // Predicated region
    $region30: #{barlow_twins_forward.1} parent=1 // pred_check
      _
    $region31: #{barlow_twins_forward.1} parent=1 // pred_check_branch
      %52 = sbr.rel (0) target = $region33
    $region32: #{barlow_twins_forward.1} parent=1 // pred_region
      %54 = vsyncadd [#allocation6], 0
      %s56 = sshll.u32 %s7, 4
      %s57 = int_to_ptr.hbm [resolvable:$true] %s56
      %s58 = sshll.u32 [#allocation7], 4
      %s59 = int_to_ptr.vmem [resolvable:$true] %s58
      %61 = dma.hbm_to_vmem [thread:$0]  %s57, 16, %s59, [#allocation6]
    $region33: #{barlow_twins_forward.1} parent=1 // pred_fallthru
      _
    // Predicated region
    $region34: #{barlow_twins_forward.1} parent=1 // pred_check
      _
    $region35: #{barlow_twins_forward.1} parent=1 // pred_check_branch
      %63 = sbr.rel (0) target = $region37
    $region36: #{barlow_twins_forward.1} parent=1 // pred_region
      %65 = vsyncadd [#allocation9], 0
      %s67 = sshll.u32 %s8, 4
      %s68 = int_to_ptr.hbm [resolvable:$true] %s67
      %s69 = sshll.u32 [#allocation8], 4
      %s70 = int_to_ptr.vmem [resolvable:$true] %s69
      %72 = dma.hbm_to_vmem [thread:$0]  %s68, 16, %s70, [#allocation9]
    $region37: #{barlow_twins_forward.1} parent=1 // pred_fallthru
      _
    // Predicated region
    $region38: #{barlow_twins_forward.1} parent=1 // pred_check
      _
    $region39: #{barlow_twins_forward.1} parent=1 // pred_check_branch
      %74 = sbr.rel (0) target = $region41
    $region40: #{barlow_twins_forward.1} parent=1 // pred_region
      %76 = vsyncadd [#allocation9], 0
      %s77 = sshll.u32 %s9, 4
      %s78 = int_to_ptr.hbm [resolvable:$true] %s77
      %s79 = sshll.u32 [#allocation10], 4
      %s80 = int_to_ptr.vmem [resolvable:$true] %s79
      %85 = dma.hbm_to_vmem [thread:$0]  %s78, 1024, %s80, [#allocation9], 64, 64, 4
    $region41: #{barlow_twins_forward.1} parent=1 // pred_fallthru
      _
    // Predicated region
    $region42: #{barlow_twins_forward.1} parent=1 // pred_check
      _
    $region43: #{barlow_twins_forward.1} parent=1 // pred_check_branch
      %87 = sbr.rel (0) target = $region45
    $region44: #{barlow_twins_forward.1} parent=1 // pred_region
      %89 = dma.done [#allocation3], 16
    $region45: #{barlow_twins_forward.1} parent=1 // pred_fallthru
      _
    // Predicated region
    $region46: #{barlow_twins_forward.1} parent=1 // pred_check
      _
    $region47: #{barlow_twins_forward.1} parent=1 // pred_check_branch
      %91 = sbr.rel (0) target = $region49
    $region48: #{barlow_twins_forward.1} parent=1 // pred_region
      %93 = dma.done [#allocation6], 16
    $region49: #{barlow_twins_forward.1} parent=1 // pred_fallthru
      _
    // Predicated region
    $region50: #{barlow_twins_forward.1} parent=1 // pred_check
      _
    $region51: #{barlow_twins_forward.1} parent=1 // pred_check_branch
      %95 = sbr.rel (0) target = $region53
    $region52: #{barlow_twins_forward.1} parent=1 // pred_region
      %97 = dma.done [#allocation6], 16
    $region53: #{barlow_twins_forward.1} parent=1 // pred_fallthru
      _
    // Predicated region
    $region54: #{barlow_twins_forward.1} parent=1 // pred_check
      _
    $region55: #{barlow_twins_forward.1} parent=1 // pred_check_branch
      %99 = sbr.rel (0) target = $region57
    $region56: #{barlow_twins_forward.1} parent=1 // pred_region
      %101 = dma.done [#allocation9], 16
    $region57: #{barlow_twins_forward.1} parent=1 // pred_fallthru
      _
    // Predicated region
    $region58: #{barlow_twins_forward.1} parent=1 // pred_check
      _
    $region59: #{barlow_twins_forward.1} parent=1 // pred_check_branch
      %103 = sbr.rel (0) target = $region61
    $region60: #{barlow_twins_forward.1} parent=1 // pred_region
      %105 = dma.done [#allocation9], 1024
    $region61: #{barlow_twins_forward.1} parent=1 // pred_fallthru
      _
    %v107 = vld [vmem:[%s2] sm:$0xf]
    %v108 = vld [vmem:[%s2 + $0x4] sm:$0xf]
    %v109 = vld [vmem:[%s2 + $0x8] sm:$0xf]
    %v110 = vld [vmem:[%s2 + $0xc] sm:$0xf]
    %v111 = vld [vmem:[%s2 + $0x10] sm:$0xf]
    %v112 = vld [vmem:[%s2 + $0x14] sm:$0xf]
    %v113 = vld [vmem:[%s2 + $0x18] sm:$0xf]
    %v114 = vld [vmem:[%s2 + $0x1c] sm:$0xf]
    %v115 = vld [vmem:[%s2 + $0x20] sm:$0xf]
    %v116 = vld [vmem:[%s2 + $0x24] sm:$0xf]
    %v117 = vld [vmem:[%s2 + $0x28] sm:$0xf]
    %v118 = vld [vmem:[%s2 + $0x2c] sm:$0xf]
    %v119 = vld [vmem:[%s2 + $0x30] sm:$0xf]
    %v120 = vld [vmem:[%s2 + $0x34] sm:$0xf]
    %v121 = vld [vmem:[%s2 + $0x38] sm:$0xf]
    %v122 = vld [vmem:[%s2 + $0x3c] sm:$0xf]
    %v123 = vld [vmem:[%s2 + $0x40] sm:$0xf]
    %v124 = vld [vmem:[%s2 + $0x44] sm:$0xf]
    %v125 = vld [vmem:[%s2 + $0x48] sm:$0xf]
    %v126 = vld [vmem:[%s2 + $0x4c] sm:$0xf]
    %v127 = vld [vmem:[%s2 + $0x50] sm:$0xf]
    %v128 = vld [vmem:[%s2 + $0x54] sm:$0xf]
    %v129 = vld [vmem:[%s2 + $0x58] sm:$0xf]
    %v130 = vld [vmem:[%s2 + $0x5c] sm:$0xf]
    %v131 = vld [vmem:[%s2 + $0x60] sm:$0xf]
    %v132 = vld [vmem:[%s2 + $0x64] sm:$0xf]
    %v133 = vld [vmem:[%s2 + $0x68] sm:$0xf]
    %v134 = vld [vmem:[%s2 + $0x6c] sm:$0xf]
    %v135 = vld [vmem:[%s2 + $0x70] sm:$0xf]
    %v136 = vld [vmem:[%s2 + $0x74] sm:$0xf]
    %v137 = vld [vmem:[%s2 + $0x78] sm:$0xf]
    %v138 = vld [vmem:[%s2 + $0x7c] sm:$0xf]
    %v139 = vld [vmem:[%s2 + $0x80] sm:$0xf]
    %v140 = vld [vmem:[%s2 + $0x84] sm:$0xf]
    %v141 = vld [vmem:[%s2 + $0x88] sm:$0xf]
    %v142 = vld [vmem:[%s2 + $0x8c] sm:$0xf]
    %v143 = vld [vmem:[%s2 + $0x90] sm:$0xf]
    %v144 = vld [vmem:[%s2 + $0x94] sm:$0xf]
    %v145 = vld [vmem:[%s2 + $0x98] sm:$0xf]
    %v146 = vld [vmem:[%s2 + $0x9c] sm:$0xf]
    %v147 = vld [vmem:[%s2 + $0xa0] sm:$0xf]
    %v148 = vld [vmem:[%s2 + $0xa4] sm:$0xf]
    %v149 = vld [vmem:[%s2 + $0xa8] sm:$0xf]
    %v150 = vld [vmem:[%s2 + $0xac] sm:$0xf]
    %v151 = vld [vmem:[%s2 + $0xb0] sm:$0xf]
    %v152 = vld [vmem:[%s2 + $0xb4] sm:$0xf]
    %v153 = vld [vmem:[%s2 + $0xb8] sm:$0xf]
    %v154 = vld [vmem:[%s2 + $0xbc] sm:$0xf]
    %v155 = vld [vmem:[%s2 + $0xc0] sm:$0xf]
    %v156 = vld [vmem:[%s2 + $0xc4] sm:$0xf]
    %v157 = vld [vmem:[%s2 + $0xc8] sm:$0xf]
    %v158 = vld [vmem:[%s2 + $0xcc] sm:$0xf]
    %v159 = vld [vmem:[%s2 + $0xd0] sm:$0xf]
    %v160 = vld [vmem:[%s2 + $0xd4] sm:$0xf]
    %v161 = vld [vmem:[%s2 + $0xd8] sm:$0xf]
    %v162 = vld [vmem:[%s2 + $0xdc] sm:$0xf]
    %v163 = vld [vmem:[%s2 + $0xe0] sm:$0xf]
    %v164 = vld [vmem:[%s2 + $0xe4] sm:$0xf]
    %v165 = vld [vmem:[%s2 + $0xe8] sm:$0xf]
    %v166 = vld [vmem:[%s2 + $0xec] sm:$0xf]
    %v167 = vld [vmem:[%s2 + $0xf0] sm:$0xf]
    %v168 = vld [vmem:[%s2 + $0xf4] sm:$0xf]
    %v169 = vld [vmem:[%s2 + $0xf8] sm:$0xf]
    %v170 = vld [vmem:[%s2 + $0xfc] sm:$0xf]
    %v171 = vld [vmem:[%s2 + $0x100] sm:$0xf]
    %v172 = vld [vmem:[%s2 + $0x104] sm:$0xf]
    %v173 = vld [vmem:[%s2 + $0x108] sm:$0xf]
    %v174 = vld [vmem:[%s2 + $0x10c] sm:$0xf]
    %v175 = vld [vmem:[%s2 + $0x110] sm:$0xf]
    %v176 = vld [vmem:[%s2 + $0x114] sm:$0xf]
    %v177 = vld [vmem:[%s2 + $0x118] sm:$0xf]
    %v178 = vld [vmem:[%s2 + $0x11c] sm:$0xf]
    %v179 = vld [vmem:[%s2 + $0x120] sm:$0xf]
    %v180 = vld [vmem:[%s2 + $0x124] sm:$0xf]
    %v181 = vld [vmem:[%s2 + $0x128] sm:$0xf]
    %v182 = vld [vmem:[%s2 + $0x12c] sm:$0xf]
    %v183 = vld [vmem:[%s2 + $0x130] sm:$0xf]
    %v184 = vld [vmem:[%s2 + $0x134] sm:$0xf]
    %v185 = vld [vmem:[%s2 + $0x138] sm:$0xf]
    %v186 = vld [vmem:[%s2 + $0x13c] sm:$0xf]
    %v187 = vld [vmem:[%s2 + $0x140] sm:$0xf]
    %v188 = vld [vmem:[%s2 + $0x144] sm:$0xf]
    %v189 = vld [vmem:[%s2 + $0x148] sm:$0xf]
    %v190 = vld [vmem:[%s2 + $0x14c] sm:$0xf]
    %v191 = vld [vmem:[%s2 + $0x150] sm:$0xf]
    %v192 = vld [vmem:[%s2 + $0x154] sm:$0xf]
    %v193 = vld [vmem:[%s2 + $0x158] sm:$0xf]
    %v194 = vld [vmem:[%s2 + $0x15c] sm:$0xf]
    %v195 = vld [vmem:[%s2 + $0x160] sm:$0xf]
    %v196 = vld [vmem:[%s2 + $0x164] sm:$0xf]
    %v197 = vld [vmem:[%s2 + $0x168] sm:$0xf]
    %v198 = vld [vmem:[%s2 + $0x16c] sm:$0xf]
    %v199 = vld [vmem:[%s2 + $0x170] sm:$0xf]
    %v200 = vld [vmem:[%s2 + $0x174] sm:$0xf]
    %v201 = vld [vmem:[%s2 + $0x178] sm:$0xf]
    %v202 = vld [vmem:[%s2 + $0x17c] sm:$0xf]
    %v203 = vld [vmem:[%s2 + $0x180] sm:$0xf]
    %v204 = vld [vmem:[%s2 + $0x184] sm:$0xf]
    %v205 = vld [vmem:[%s2 + $0x188] sm:$0xf]
    %v206 = vld [vmem:[%s2 + $0x18c] sm:$0xf]
    %v207 = vld [vmem:[%s2 + $0x190] sm:$0xf]
    %v208 = vld [vmem:[%s2 + $0x194] sm:$0xf]
    %v209 = vld [vmem:[%s2 + $0x198] sm:$0xf]
    %v210 = vld [vmem:[%s2 + $0x19c] sm:$0xf]
    %v211 = vld [vmem:[%s2 + $0x1a0] sm:$0xf]
    %v212 = vld [vmem:[%s2 + $0x1a4] sm:$0xf]
    %v213 = vld [vmem:[%s2 + $0x1a8] sm:$0xf]
    %v214 = vld [vmem:[%s2 + $0x1ac] sm:$0xf]
    %v215 = vld [vmem:[%s2 + $0x1b0] sm:$0xf]
    %v216 = vld [vmem:[%s2 + $0x1b4] sm:$0xf]
    %v217 = vld [vmem:[%s2 + $0x1b8] sm:$0xf]
    %v218 = vld [vmem:[%s2 + $0x1bc] sm:$0xf]
    %v219 = vld [vmem:[%s2 + $0x1c0] sm:$0xf]
    %v220 = vld [vmem:[%s2 + $0x1c4] sm:$0xf]
    %v221 = vld [vmem:[%s2 + $0x1c8] sm:$0xf]
    %v222 = vld [vmem:[%s2 + $0x1cc] sm:$0xf]
    %v223 = vld [vmem:[%s2 + $0x1d0] sm:$0xf]
    %v224 = vld [vmem:[%s2 + $0x1d4] sm:$0xf]
    %v225 = vld [vmem:[%s2 + $0x1d8] sm:$0xf]
    %v226 = vld [vmem:[%s2 + $0x1dc] sm:$0xf]
    %v227 = vld [vmem:[%s2 + $0x1e0] sm:$0xf]
    %v228 = vld [vmem:[%s2 + $0x1e4] sm:$0xf]
    %v229 = vld [vmem:[%s2 + $0x1e8] sm:$0xf]
    %v230 = vld [vmem:[%s2 + $0x1ec] sm:$0xf]
    %v231 = vld [vmem:[%s2 + $0x1f0] sm:$0xf]
    %v232 = vld [vmem:[%s2 + $0x1f4] sm:$0xf]
    %v233 = vld [vmem:[%s2 + $0x1f8] sm:$0xf]
    %v234 = vld [vmem:[%s2 + $0x1fc] sm:$0xf]
    %v235 = vld [vmem:[%s3] sm:$0xf]
    %v236 = vld [vmem:[%s3 + $0x4] sm:$0xf]
    %v237 = vld [vmem:[%s3 + $0x8] sm:$0xf]
    %v238 = vld [vmem:[%s3 + $0xc] sm:$0xf]
    %v239 = vld [vmem:[%s3 + $0x10] sm:$0xf]
    %v240 = vld [vmem:[%s3 + $0x14] sm:$0xf]
    %v241 = vld [vmem:[%s3 + $0x18] sm:$0xf]
    %v242 = vld [vmem:[%s3 + $0x1c] sm:$0xf]
    %v243 = vld [vmem:[%s3 + $0x20] sm:$0xf]
    %v244 = vld [vmem:[%s3 + $0x24] sm:$0xf]
    %v245 = vld [vmem:[%s3 + $0x28] sm:$0xf]
    %v246 = vld [vmem:[%s3 + $0x2c] sm:$0xf]
    %v247 = vld [vmem:[%s3 + $0x30] sm:$0xf]
    %v248 = vld [vmem:[%s3 + $0x34] sm:$0xf]
    %v249 = vld [vmem:[%s3 + $0x38] sm:$0xf]
    %v250 = vld [vmem:[%s3 + $0x3c] sm:$0xf]
    %v251 = vld [vmem:[#allocation2] sm:$0x1]
    %v252 = vld [vmem:[#allocation5] sm:$0x1]
    %v253 = vld [vmem:[%s6] sm:$0xf]
    %v254 = vld [vmem:[%s6 + $0x4] sm:$0xf]
    %v255 = vld [vmem:[%s6 + $0x8] sm:$0xf]
    %v256 = vld [vmem:[%s6 + $0xc] sm:$0xf]
    %v257 = vld [vmem:[%s6 + $0x10] sm:$0xf]
    %v258 = vld [vmem:[%s6 + $0x14] sm:$0xf]
    %v259 = vld [vmem:[%s6 + $0x18] sm:$0xf]
    %v260 = vld [vmem:[%s6 + $0x1c] sm:$0xf]
    %v261 = vld [vmem:[%s6 + $0x20] sm:$0xf]
    %v262 = vld [vmem:[%s6 + $0x24] sm:$0xf]
    %v263 = vld [vmem:[%s6 + $0x28] sm:$0xf]
    %v264 = vld [vmem:[%s6 + $0x2c] sm:$0xf]
    %v265 = vld [vmem:[%s6 + $0x30] sm:$0xf]
    %v266 = vld [vmem:[%s6 + $0x34] sm:$0xf]
    %v267 = vld [vmem:[%s6 + $0x38] sm:$0xf]
    %v268 = vld [vmem:[%s6 + $0x3c] sm:$0xf]
    %v269 = vld [vmem:[#allocation7] sm:$0x1]
    %v270 = vld [vmem:[#allocation8] sm:$0x1]
    %v271 = vld [vmem:[#allocation10] sm:$0xf]
    %v272 = vld [vmem:[#allocation10 + $0x4] sm:$0xf]
    %v273 = vld [vmem:[#allocation10 + $0x8] sm:$0xf]
    %v274 = vld [vmem:[#allocation10 + $0xc] sm:$0xf]
    %v275 = vld [vmem:[#allocation10 + $0x10] sm:$0xf]
    %v276 = vld [vmem:[#allocation10 + $0x14] sm:$0xf]
    %v277 = vld [vmem:[#allocation10 + $0x18] sm:$0xf]
    %v278 = vld [vmem:[#allocation10 + $0x1c] sm:$0xf]
    %v279 = vld [vmem:[#allocation10 + $0x20] sm:$0xf]
    %v280 = vld [vmem:[#allocation10 + $0x24] sm:$0xf]
    %v281 = vld [vmem:[#allocation10 + $0x28] sm:$0xf]
    %v282 = vld [vmem:[#allocation10 + $0x2c] sm:$0xf]
    %v283 = vld [vmem:[#allocation10 + $0x30] sm:$0xf]
    %v284 = vld [vmem:[#allocation10 + $0x34] sm:$0xf]
    %v285 = vld [vmem:[#allocation10 + $0x38] sm:$0xf]
    %v286 = vld [vmem:[#allocation10 + $0x3c] sm:$0xf]
    %v287 = vld [vmem:[%s0] sm:$0xff]
    %v288 = vld [vmem:[%s0 + $0x8] sm:$0xff]
    %v289 = vld [vmem:[%s0 + $0x10] sm:$0xff]
    %v290 = vld [vmem:[%s0 + $0x18] sm:$0xff]
    %v291 = vld [vmem:[%s0 + $0x20] sm:$0xff]
    %v292 = vld [vmem:[%s0 + $0x28] sm:$0xff]
    %v293 = vld [vmem:[%s0 + $0x30] sm:$0xff]
    %v294 = vld [vmem:[%s0 + $0x38] sm:$0xff]
    %v295 = vpack.c.bf16 %v287, %v287
    %v296 = vpack.c.bf16 %v288, %v288
    %v297 = vpack.c.bf16 %v289, %v289
    %v298 = vpack.c.bf16 %v290, %v290
    %v299 = vpack.c.bf16 %v291, %v291
    %v300 = vpack.c.bf16 %v292, %v292
    %v301 = vpack.c.bf16 %v293, %v293
    %v302 = vpack.c.bf16 %v294, %v294
    %v431 = vunpack.c.l.b16 %v107
    %v432 = vunpack.c.l.b16 %v108
    %v433 = vunpack.c.l.b16 %v109
    %v434 = vunpack.c.l.b16 %v110
    %v435 = vunpack.c.l.b16 %v111
    %v436 = vunpack.c.l.b16 %v112
    %v437 = vunpack.c.l.b16 %v113
    %v438 = vunpack.c.l.b16 %v114
    %v439 = vunpack.c.l.b16 %v115
    %v440 = vunpack.c.l.b16 %v116
    %v441 = vunpack.c.l.b16 %v117
    %v442 = vunpack.c.l.b16 %v118
    %v443 = vunpack.c.l.b16 %v119
    %v444 = vunpack.c.l.b16 %v120
    %v445 = vunpack.c.l.b16 %v121
    %v446 = vunpack.c.l.b16 %v122
    %v447 = vunpack.c.l.b16 %v123
    %v448 = vunpack.c.l.b16 %v124
    %v449 = vunpack.c.l.b16 %v125
    %v450 = vunpack.c.l.b16 %v126
    %v451 = vunpack.c.l.b16 %v127
    %v452 = vunpack.c.l.b16 %v128
    %v453 = vunpack.c.l.b16 %v129
    %v454 = vunpack.c.l.b16 %v130
    %v455 = vunpack.c.l.b16 %v131
    %v456 = vunpack.c.l.b16 %v132
    %v457 = vunpack.c.l.b16 %v133
    %v458 = vunpack.c.l.b16 %v134
    %v459 = vunpack.c.l.b16 %v135
    %v460 = vunpack.c.l.b16 %v136
    %v461 = vunpack.c.l.b16 %v137
    %v462 = vunpack.c.l.b16 %v138
    %v463 = vunpack.c.l.b16 %v139
    %v464 = vunpack.c.l.b16 %v140
    %v465 = vunpack.c.l.b16 %v141
    %v466 = vunpack.c.l.b16 %v142
    %v467 = vunpack.c.l.b16 %v143
    %v468 = vunpack.c.l.b16 %v144
    %v469 = vunpack.c.l.b16 %v145
    %v470 = vunpack.c.l.b16 %v146
    %v471 = vunpack.c.l.b16 %v147
    %v472 = vunpack.c.l.b16 %v148
    %v473 = vunpack.c.l.b16 %v149
    %v474 = vunpack.c.l.b16 %v150
    %v475 = vunpack.c.l.b16 %v151
    %v476 = vunpack.c.l.b16 %v152
    %v477 = vunpack.c.l.b16 %v153
    %v478 = vunpack.c.l.b16 %v154
    %v479 = vunpack.c.l.b16 %v155
    %v480 = vunpack.c.l.b16 %v156
    %v481 = vunpack.c.l.b16 %v157
    %v482 = vunpack.c.l.b16 %v158
    %v483 = vunpack.c.l.b16 %v159
    %v484 = vunpack.c.l.b16 %v160
    %v485 = vunpack.c.l.b16 %v161
    %v486 = vunpack.c.l.b16 %v162
    %v487 = vunpack.c.l.b16 %v163
    %v488 = vunpack.c.l.b16 %v164
    %v489 = vunpack.c.l.b16 %v165
    %v490 = vunpack.c.l.b16 %v166
    %v491 = vunpack.c.l.b16 %v167
    %v492 = vunpack.c.l.b16 %v168
    %v493 = vunpack.c.l.b16 %v169
    %v494 = vunpack.c.l.b16 %v170
    %v495 = vunpack.c.l.b16 %v171
    %v496 = vunpack.c.l.b16 %v172
    %v497 = vunpack.c.l.b16 %v173
    %v498 = vunpack.c.l.b16 %v174
    %v499 = vunpack.c.l.b16 %v175
    %v500 = vunpack.c.l.b16 %v176
    %v501 = vunpack.c.l.b16 %v177
    %v502 = vunpack.c.l.b16 %v178
    %v503 = vunpack.c.l.b16 %v179
    %v504 = vunpack.c.l.b16 %v180
    %v505 = vunpack.c.l.b16 %v181
    %v506 = vunpack.c.l.b16 %v182
    %v507 = vunpack.c.l.b16 %v183
    %v508 = vunpack.c.l.b16 %v184
    %v509 = vunpack.c.l.b16 %v185
    %v510 = vunpack.c.l.b16 %v186
    %v511 = vunpack.c.l.b16 %v187
    %v512 = vunpack.c.l.b16 %v188
    %v513 = vunpack.c.l.b16 %v189
    %v514 = vunpack.c.l.b16 %v190
    %v515 = vunpack.c.l.b16 %v191
    %v516 = vunpack.c.l.b16 %v192
    %v517 = vunpack.c.l.b16 %v193
    %v518 = vunpack.c.l.b16 %v194
    %v519 = vunpack.c.l.b16 %v195
    %v520 = vunpack.c.l.b16 %v196
    %v521 = vunpack.c.l.b16 %v197
    %v522 = vunpack.c.l.b16 %v198
    %v523 = vunpack.c.l.b16 %v199
    %v524 = vunpack.c.l.b16 %v200
    %v525 = vunpack.c.l.b16 %v201
    %v526 = vunpack.c.l.b16 %v202
    %v527 = vunpack.c.l.b16 %v203
    %v528 = vunpack.c.l.b16 %v204
    %v529 = vunpack.c.l.b16 %v205
    %v530 = vunpack.c.l.b16 %v206
    %v531 = vunpack.c.l.b16 %v207
    %v532 = vunpack.c.l.b16 %v208
    %v533 = vunpack.c.l.b16 %v209
    %v534 = vunpack.c.l.b16 %v210
    %v535 = vunpack.c.l.b16 %v211
    %v536 = vunpack.c.l.b16 %v212
    %v537 = vunpack.c.l.b16 %v213
    %v538 = vunpack.c.l.b16 %v214
    %v539 = vunpack.c.l.b16 %v215
    %v540 = vunpack.c.l.b16 %v216
    %v541 = vunpack.c.l.b16 %v217
    %v542 = vunpack.c.l.b16 %v218
    %v543 = vunpack.c.l.b16 %v219
    %v544 = vunpack.c.l.b16 %v220
    %v545 = vunpack.c.l.b16 %v221
    %v546 = vunpack.c.l.b16 %v222
    %v547 = vunpack.c.l.b16 %v223
    %v548 = vunpack.c.l.b16 %v224
    %v549 = vunpack.c.l.b16 %v225
    %v550 = vunpack.c.l.b16 %v226
    %v551 = vunpack.c.l.b16 %v227
    %v552 = vunpack.c.l.b16 %v228
    %v553 = vunpack.c.l.b16 %v229
    %v554 = vunpack.c.l.b16 %v230
    %v555 = vunpack.c.l.b16 %v231
    %v556 = vunpack.c.l.b16 %v232
    %v557 = vunpack.c.l.b16 %v233
    %v558 = vunpack.c.l.b16 %v234
    %v559 = vpack.c.b16 %v432, %v431
    %v560 = vpack.c.b16 %v434, %v433
    %v561 = vpack.c.b16 %v436, %v435
    %v562 = vpack.c.b16 %v438, %v437
    %v563 = vpack.c.b16 %v440, %v439
    %v564 = vpack.c.b16 %v442, %v441
    %v565 = vpack.c.b16 %v444, %v443
    %v566 = vpack.c.b16 %v446, %v445
    %v567 = vpack.c.b16 %v448, %v447
    %v568 = vpack.c.b16 %v450, %v449
    %v569 = vpack.c.b16 %v452, %v451
    %v570 = vpack.c.b16 %v454, %v453
    %v571 = vpack.c.b16 %v456, %v455
    %v572 = vpack.c.b16 %v458, %v457
    %v573 = vpack.c.b16 %v460, %v459
    %v574 = vpack.c.b16 %v462, %v461
    %v575 = vpack.c.b16 %v464, %v463
    %v576 = vpack.c.b16 %v466, %v465
    %v577 = vpack.c.b16 %v468, %v467
    %v578 = vpack.c.b16 %v470, %v469
    %v579 = vpack.c.b16 %v472, %v471
    %v580 = vpack.c.b16 %v474, %v473
    %v581 = vpack.c.b16 %v476, %v475
    %v582 = vpack.c.b16 %v478, %v477
    %v583 = vpack.c.b16 %v480, %v479
    %v584 = vpack.c.b16 %v482, %v481
    %v585 = vpack.c.b16 %v484, %v483
    %v586 = vpack.c.b16 %v486, %v485
    %v587 = vpack.c.b16 %v488, %v487
    %v588 = vpack.c.b16 %v490, %v489
    %v589 = vpack.c.b16 %v492, %v491
    %v590 = vpack.c.b16 %v494, %v493
    %v591 = vpack.c.b16 %v496, %v495
    %v592 = vpack.c.b16 %v498, %v497
    %v593 = vpack.c.b16 %v500, %v499
    %v594 = vpack.c.b16 %v502, %v501
    %v595 = vpack.c.b16 %v504, %v503
    %v596 = vpack.c.b16 %v506, %v505
    %v597 = vpack.c.b16 %v508, %v507
    %v598 = vpack.c.b16 %v510, %v509
    %v599 = vpack.c.b16 %v512, %v511
    %v600 = vpack.c.b16 %v514, %v513
    %v601 = vpack.c.b16 %v516, %v515
    %v602 = vpack.c.b16 %v518, %v517
    %v603 = vpack.c.b16 %v520, %v519
    %v604 = vpack.c.b16 %v522, %v521
    %v605 = vpack.c.b16 %v524, %v523
    %v606 = vpack.c.b16 %v526, %v525
    %v607 = vpack.c.b16 %v528, %v527
    %v608 = vpack.c.b16 %v530, %v529
    %v609 = vpack.c.b16 %v532, %v531
    %v610 = vpack.c.b16 %v534, %v533
    %v611 = vpack.c.b16 %v536, %v535
    %v612 = vpack.c.b16 %v538, %v537
    %v613 = vpack.c.b16 %v540, %v539
    %v614 = vpack.c.b16 %v542, %v541
    %v615 = vpack.c.b16 %v544, %v543
    %v616 = vpack.c.b16 %v546, %v545
    %v617 = vpack.c.b16 %v548, %v547
    %v618 = vpack.c.b16 %v550, %v549
    %v619 = vpack.c.b16 %v552, %v551
    %v620 = vpack.c.b16 %v554, %v553
    %v621 = vpack.c.b16 %v556, %v555
    %v622 = vpack.c.b16 %v558, %v557
    %687 = vmatpush.bf16.msra.mxu0 %v566
    %688 = vmatpush.bf16.msra.mxu0 %v565
    %689 = vmatpush.bf16.msra.mxu0 %v564
    %690 = vmatpush.bf16.msra.mxu0 %v563
    %691 = vmatpush.bf16.msra.mxu0 %v562
    %692 = vmatpush.bf16.msra.mxu0 %v561
    %693 = vmatpush.bf16.msra.mxu0 %v560
    %694 = vmatpush.bf16.msra.mxu0 %v559
    %695 = vmatmul.bf16.gmra.mxu0 %v295
    %v696 = vpop.f32.mrf.mxu0
    %v697 = vadd.f32 0.0, %v696
    %v698 = vpop.f32.mrf.mxu0
    %699 = vdwg.mxu0
    %700 = vmatpush.bf16.msra.mxu0 %v574
    %701 = vmatpush.bf16.msra.mxu0 %v573
    %702 = vmatpush.bf16.msra.mxu0 %v572
    %703 = vmatpush.bf16.msra.mxu0 %v571
    %704 = vmatpush.bf16.msra.mxu0 %v570
    %705 = vmatpush.bf16.msra.mxu0 %v569
    %706 = vmatpush.bf16.msra.mxu0 %v568
    %707 = vmatpush.bf16.msra.mxu0 %v567
    %708 = vmatmul.bf16.gmra.mxu0 %v296
    %v709 = vpop.f32.mrf.mxu0
    %v710 = vadd.f32 %v697, %v709
    %v711 = vpop.f32.mrf.mxu0
    %712 = vdwg.mxu0
    %713 = vmatpush.bf16.msra.mxu0 %v582
    %714 = vmatpush.bf16.msra.mxu0 %v581
    %715 = vmatpush.bf16.msra.mxu0 %v580
    %716 = vmatpush.bf16.msra.mxu0 %v579
    %717 = vmatpush.bf16.msra.mxu0 %v578
    %718 = vmatpush.bf16.msra.mxu0 %v577
    %719 = vmatpush.bf16.msra.mxu0 %v576
    %720 = vmatpush.bf16.msra.mxu0 %v575
    %721 = vmatmul.bf16.gmra.mxu0 %v297
    %v722 = vpop.f32.mrf.mxu0
    %v723 = vadd.f32 %v710, %v722
    %v724 = vpop.f32.mrf.mxu0
    %725 = vdwg.mxu0
    %726 = vmatpush.bf16.msra.mxu0 %v590
    %727 = vmatpush.bf16.msra.mxu0 %v589
    %728 = vmatpush.bf16.msra.mxu0 %v588
    %729 = vmatpush.bf16.msra.mxu0 %v587
    %730 = vmatpush.bf16.msra.mxu0 %v586
    %731 = vmatpush.bf16.msra.mxu0 %v585
    %732 = vmatpush.bf16.msra.mxu0 %v584
    %733 = vmatpush.bf16.msra.mxu0 %v583
    %734 = vmatmul.bf16.gmra.mxu0 %v298
    %v735 = vpop.f32.mrf.mxu0
    %v736 = vadd.f32 %v723, %v735
    %v737 = vpop.f32.mrf.mxu0
    %738 = vdwg.mxu0
    %739 = vmatpush.bf16.msra.mxu0 %v598
    %740 = vmatpush.bf16.msra.mxu0 %v597
    %741 = vmatpush.bf16.msra.mxu0 %v596
    %742 = vmatpush.bf16.msra.mxu0 %v595
    %743 = vmatpush.bf16.msra.mxu0 %v594
    %744 = vmatpush.bf16.msra.mxu0 %v593
    %745 = vmatpush.bf16.msra.mxu0 %v592
    %746 = vmatpush.bf16.msra.mxu0 %v591
    %747 = vmatmul.bf16.gmra.mxu0 %v299
    %v748 = vpop.f32.mrf.mxu0
    %v749 = vadd.f32 %v736, %v748
    %v750 = vpop.f32.mrf.mxu0
    %751 = vdwg.mxu0
    %752 = vmatpush.bf16.msra.mxu0 %v606
    %753 = vmatpush.bf16.msra.mxu0 %v605
    %754 = vmatpush.bf16.msra.mxu0 %v604
    %755 = vmatpush.bf16.msra.mxu0 %v603
    %756 = vmatpush.bf16.msra.mxu0 %v602
    %757 = vmatpush.bf16.msra.mxu0 %v601
    %758 = vmatpush.bf16.msra.mxu0 %v600
    %759 = vmatpush.bf16.msra.mxu0 %v599
    %760 = vmatmul.bf16.gmra.mxu0 %v300
    %v761 = vpop.f32.mrf.mxu0
    %v762 = vadd.f32 %v749, %v761
    %v763 = vpop.f32.mrf.mxu0
    %764 = vdwg.mxu0
    %765 = vmatpush.bf16.msra.mxu0 %v614
    %766 = vmatpush.bf16.msra.mxu0 %v613
    %767 = vmatpush.bf16.msra.mxu0 %v612
    %768 = vmatpush.bf16.msra.mxu0 %v611
    %769 = vmatpush.bf16.msra.mxu0 %v610
    %770 = vmatpush.bf16.msra.mxu0 %v609
    %771 = vmatpush.bf16.msra.mxu0 %v608
    %772 = vmatpush.bf16.msra.mxu0 %v607
    %773 = vmatmul.bf16.gmra.mxu0 %v301
    %v774 = vpop.f32.mrf.mxu0
    %v775 = vadd.f32 %v762, %v774
    %v776 = vpop.f32.mrf.mxu0
    %777 = vdwg.mxu0
    %778 = vmatpush.bf16.msra.mxu0 %v622
    %779 = vmatpush.bf16.msra.mxu0 %v621
    %780 = vmatpush.bf16.msra.mxu0 %v620
    %781 = vmatpush.bf16.msra.mxu0 %v619
    %782 = vmatpush.bf16.msra.mxu0 %v618
    %783 = vmatpush.bf16.msra.mxu0 %v617
    %784 = vmatpush.bf16.msra.mxu0 %v616
    %785 = vmatpush.bf16.msra.mxu0 %v615
    %786 = vmatmul.bf16.gmra.mxu0 %v302
    %v787 = vpop.f32.mrf.mxu0
    %v788 = vadd.f32 %v775, %v787
    %v789 = vpop.f32.mrf.mxu0
    %790 = vdwg.mxu0
    %v791 = vpack.c.bf16 %v788, %v788
    %v808 = vunpack.c.l.b16 %v235
    %v809 = vunpack.c.l.b16 %v236
    %v810 = vunpack.c.l.b16 %v237
    %v811 = vunpack.c.l.b16 %v238
    %v812 = vunpack.c.l.b16 %v239
    %v813 = vunpack.c.l.b16 %v240
    %v814 = vunpack.c.l.b16 %v241
    %v815 = vunpack.c.l.b16 %v242
    %v816 = vunpack.c.l.b16 %v243
    %v817 = vunpack.c.l.b16 %v244
    %v818 = vunpack.c.l.b16 %v245
    %v819 = vunpack.c.l.b16 %v246
    %v820 = vunpack.c.l.b16 %v247
    %v821 = vunpack.c.l.b16 %v248
    %v822 = vunpack.c.l.b16 %v249
    %v823 = vunpack.c.l.b16 %v250
    %v824 = vpack.c.b16 %v809, %v808
    %v825 = vpack.c.b16 %v811, %v810
    %v826 = vpack.c.b16 %v813, %v812
    %v827 = vpack.c.b16 %v815, %v814
    %v828 = vpack.c.b16 %v817, %v816
    %v829 = vpack.c.b16 %v819, %v818
    %v830 = vpack.c.b16 %v821, %v820
    %v831 = vpack.c.b16 %v823, %v822
    %840 = vmatpush.bf16.msra.mxu0 %v831
    %841 = vmatpush.bf16.msra.mxu0 %v830
    %842 = vmatpush.bf16.msra.mxu0 %v829
    %843 = vmatpush.bf16.msra.mxu0 %v828
    %844 = vmatpush.bf16.msra.mxu0 %v827
    %845 = vmatpush.bf16.msra.mxu0 %v826
    %846 = vmatpush.bf16.msra.mxu0 %v825
    %847 = vmatpush.bf16.msra.mxu0 %v824
    %848 = vmatmul.bf16.gmra.mxu0 %v791
    %v849 = vpop.f32.mrf.mxu0
    %v850 = vadd.f32 0.0, %v849
    %v851 = vpop.f32.mrf.mxu0
    %852 = vdwg.mxu0
    %v853 = vrot.slane %v850, 4
    %v854 = vadd.f32 %v850, %v853
    %v855 = vrot.slane %v854, 2
    %v856 = vadd.f32 %v854, %v855
    %v857 = vrot.slane %v856, 1
    %v858 = vadd.f32 %v856, %v857
    %v859 = vrcp.pop 8.0
    %v860 = vmul.f32 8.0, %v859
    %v861 = vsub.f32 1.0, %v860
    %v862 = vmul.f32 %v859, %v861
    %v863 = vadd.f32 %v859, %v862
    %vm864 = vweird.f32 %v859
    %v865 = vsel %vm864, %v859, %v863
    %v866 = vmul.f32 %v858, %v865
    %v867 = vsub.f32 %v850, %v866
    %v868 = vmul.f32 %v867, %v867
    %v869 = vrot.slane %v868, 4
    %v870 = vadd.f32 %v868, %v869
    %v871 = vrot.slane %v870, 2
    %v872 = vadd.f32 %v870, %v871
    %v873 = vrot.slane %v872, 1
    %v874 = vadd.f32 %v872, %v873
    %v875 = vmul.f32 %v874, %v865
    %v876 = vadd.f32 %v875, 1e-05
    %v877 = vrsqrt.pop %v876
    %v878 = vmul.f32 %v877, %v876
    %v879 = vmul.f32 %v878, %v877
    %v880 = vmul.f32 0.5, %v879
    %v881 = vsub.f32 1.5, %v880
    %v882 = vmul.f32 %v877, %v881
    %vm883 = vweird.f32 %v876
    %vm884 = vweird.f32 %v877
    %vm885 = vmor %vm883, %vm884
    %v886 = vsel %vm885, %v877, %v882
    %v887 = vmul.f32 %v867, %v886
    %v889 = vperm.slane %v251, 0
    %v891 = vmul.f32 %v887, %v889
    %v893 = vperm.slane %v252, 0
    %v895 = vadd.f32 %v891, %v893
    %v896 = vmax.f32 %v895, 0.0
    %v897 = vpack.c.bf16 %v896, %v896
    %v914 = vunpack.c.l.b16 %v253
    %v915 = vunpack.c.l.b16 %v254
    %v916 = vunpack.c.l.b16 %v255
    %v917 = vunpack.c.l.b16 %v256
    %v918 = vunpack.c.l.b16 %v257
    %v919 = vunpack.c.l.b16 %v258
    %v920 = vunpack.c.l.b16 %v259
    %v921 = vunpack.c.l.b16 %v260
    %v922 = vunpack.c.l.b16 %v261
    %v923 = vunpack.c.l.b16 %v262
    %v924 = vunpack.c.l.b16 %v263
    %v925 = vunpack.c.l.b16 %v264
    %v926 = vunpack.c.l.b16 %v265
    %v927 = vunpack.c.l.b16 %v266
    %v928 = vunpack.c.l.b16 %v267
    %v929 = vunpack.c.l.b16 %v268
    %v930 = vpack.c.b16 %v915, %v914
    %v931 = vpack.c.b16 %v917, %v916
    %v932 = vpack.c.b16 %v919, %v918
    %v933 = vpack.c.b16 %v921, %v920
    %v934 = vpack.c.b16 %v923, %v922
    %v935 = vpack.c.b16 %v925, %v924
    %v936 = vpack.c.b16 %v927, %v926
    %v937 = vpack.c.b16 %v929, %v928
    %946 = vmatpush.bf16.msra.mxu0 %v937
    %947 = vmatpush.bf16.msra.mxu0 %v936
    %948 = vmatpush.bf16.msra.mxu0 %v935
    %949 = vmatpush.bf16.msra.mxu0 %v934
    %950 = vmatpush.bf16.msra.mxu0 %v933
    %951 = vmatpush.bf16.msra.mxu0 %v932
    %952 = vmatpush.bf16.msra.mxu0 %v931
    %953 = vmatpush.bf16.msra.mxu0 %v930
    %954 = vmatmul.bf16.gmra.mxu0 %v897
    %v955 = vpop.f32.mrf.mxu0
    %v956 = vadd.f32 0.0, %v955
    %v957 = vpop.f32.mrf.mxu0
    %958 = vdwg.mxu0
    %v959 = vrot.slane %v956, 4
    %v960 = vadd.f32 %v956, %v959
    %v961 = vrot.slane %v960, 2
    %v962 = vadd.f32 %v960, %v961
    %v963 = vrot.slane %v962, 1
    %v964 = vadd.f32 %v962, %v963
    %v965 = vmul.f32 %v964, %v865
    %v966 = vsub.f32 %v956, %v965
    %v967 = vmul.f32 %v966, %v966
    %v968 = vrot.slane %v967, 4
    %v969 = vadd.f32 %v967, %v968
    %v970 = vrot.slane %v969, 2
    %v971 = vadd.f32 %v969, %v970
    %v972 = vrot.slane %v971, 1
    %v973 = vadd.f32 %v971, %v972
    %v974 = vmul.f32 %v973, %v865
    %v975 = vadd.f32 %v974, 1e-05
    %v976 = vrsqrt.pop %v975
    %v977 = vmul.f32 %v976, %v975
    %v978 = vmul.f32 %v977, %v976
    %v979 = vmul.f32 0.5, %v978
    %v980 = vsub.f32 1.5, %v979
    %v981 = vmul.f32 %v976, %v980
    %vm982 = vweird.f32 %v975
    %vm983 = vweird.f32 %v976
    %vm984 = vmor %vm982, %vm983
    %v985 = vsel %vm984, %v976, %v981
    %v986 = vmul.f32 %v966, %v985
    %v988 = vperm.slane %v269, 0
    %v990 = vmul.f32 %v986, %v988
    %v992 = vperm.slane %v270, 0
    %v994 = vadd.f32 %v990, %v992
    %v995 = vmax.f32 %v994, 0.0
    %v996 = vpack.c.bf16 %v995, %v995
    %v1013 = vunpack.c.l.b16 %v271
    %v1014 = vunpack.c.l.b16 %v272
    %v1015 = vunpack.c.l.b16 %v273
    %v1016 = vunpack.c.l.b16 %v274
    %v1017 = vunpack.c.l.b16 %v275
    %v1018 = vunpack.c.l.b16 %v276
    %v1019 = vunpack.c.l.b16 %v277
    %v1020 = vunpack.c.l.b16 %v278
    %v1021 = vunpack.c.l.b16 %v279
    %v1022 = vunpack.c.l.b16 %v280
    %v1023 = vunpack.c.l.b16 %v281
    %v1024 = vunpack.c.l.b16 %v282
    %v1025 = vunpack.c.l.b16 %v283
    %v1026 = vunpack.c.l.b16 %v284
    %v1027 = vunpack.c.l.b16 %v285
    %v1028 = vunpack.c.l.b16 %v286
    %v1029 = vpack.c.b16 %v1014, %v1013
    %v1030 = vpack.c.b16 %v1016, %v1015
    %v1031 = vpack.c.b16 %v1018, %v1017
    %v1032 = vpack.c.b16 %v1020, %v1019
    %v1033 = vpack.c.b16 %v1022, %v1021
    %v1034 = vpack.c.b16 %v1024, %v1023
    %v1035 = vpack.c.b16 %v1026, %v1025
    %v1036 = vpack.c.b16 %v1028, %v1027
    %1045 = vmatpush.bf16.msra.mxu0 %v1036
    %1046 = vmatpush.bf16.msra.mxu0 %v1035
    %1047 = vmatpush.bf16.msra.mxu0 %v1034
    %1048 = vmatpush.bf16.msra.mxu0 %v1033
    %1049 = vmatpush.bf16.msra.mxu0 %v1032
    %1050 = vmatpush.bf16.msra.mxu0 %v1031
    %1051 = vmatpush.bf16.msra.mxu0 %v1030
    %1052 = vmatpush.bf16.msra.mxu0 %v1029
    %1053 = vmatmul.bf16.gmra.mxu0 %v996
    %v1054 = vpop.f32.mrf.mxu0
    %v1055 = vadd.f32 0.0, %v1054
    %v1056 = vpop.f32.mrf.mxu0
    %1057 = vdwg.mxu0
    %v1058 = vrot.slane %v1055, 4
    %v1059 = vadd.f32 %v1055, %v1058
    %v1060 = vrot.slane %v1059, 2
    %v1061 = vadd.f32 %v1059, %v1060
    %v1062 = vrot.slane %v1061, 1
    %v1063 = vadd.f32 %v1061, %v1062
    %v1064 = vmul.f32 %v1063, %v865
    %v1065 = vsub.f32 %v1055, %v1064
    %v1066 = vmul.f32 %v1065, %v1065
    %v1067 = vrot.slane %v1066, 4
    %v1068 = vadd.f32 %v1066, %v1067
    %v1069 = vrot.slane %v1068, 2
    %v1070 = vadd.f32 %v1068, %v1069
    %v1071 = vrot.slane %v1070, 1
    %v1072 = vadd.f32 %v1070, %v1071
    %v1073 = vmul.f32 %v1072, %v865
    %v1074 = vadd.f32 %v1073, 1e-05
    %v1075 = vrsqrt.pop %v1074
    %v1076 = vmul.f32 %v1075, %v1074
    %v1077 = vmul.f32 %v1076, %v1075
    %v1078 = vmul.f32 0.5, %v1077
    %v1079 = vsub.f32 1.5, %v1078
    %v1080 = vmul.f32 %v1075, %v1079
    %vm1081 = vweird.f32 %v1074
    %vm1082 = vweird.f32 %v1075
    %vm1083 = vmor %vm1081, %vm1082
    %v1084 = vsel %vm1083, %v1075, %v1080
    %v1085 = vmul.f32 %v1065, %v1084
    %v1086 = vld [vmem:[%s1] sm:$0xff]
    %v1087 = vld [vmem:[%s1 + $0x8] sm:$0xff]
    %v1088 = vld [vmem:[%s1 + $0x10] sm:$0xff]
    %v1089 = vld [vmem:[%s1 + $0x18] sm:$0xff]
    %v1090 = vld [vmem:[%s1 + $0x20] sm:$0xff]
    %v1091 = vld [vmem:[%s1 + $0x28] sm:$0xff]
    %v1092 = vld [vmem:[%s1 + $0x30] sm:$0xff]
    %v1093 = vld [vmem:[%s1 + $0x38] sm:$0xff]
    %v1094 = vpack.c.bf16 %v1086, %v1086
    %v1095 = vpack.c.bf16 %v1087, %v1087
    %v1096 = vpack.c.bf16 %v1088, %v1088
    %v1097 = vpack.c.bf16 %v1089, %v1089
    %v1098 = vpack.c.bf16 %v1090, %v1090
    %v1099 = vpack.c.bf16 %v1091, %v1091
    %v1100 = vpack.c.bf16 %v1092, %v1092
    %v1101 = vpack.c.bf16 %v1093, %v1093
    %1102 = vmatpush.bf16.msra.mxu0 %v566
    %1103 = vmatpush.bf16.msra.mxu0 %v565
    %1104 = vmatpush.bf16.msra.mxu0 %v564
    %1105 = vmatpush.bf16.msra.mxu0 %v563
    %1106 = vmatpush.bf16.msra.mxu0 %v562
    %1107 = vmatpush.bf16.msra.mxu0 %v561
    %1108 = vmatpush.bf16.msra.mxu0 %v560
    %1109 = vmatpush.bf16.msra.mxu0 %v559
    %1110 = vmatmul.bf16.gmra.mxu0 %v1094
    %v1111 = vpop.f32.mrf.mxu0
    %v1112 = vadd.f32 0.0, %v1111
    %v1113 = vpop.f32.mrf.mxu0
    %1114 = vdwg.mxu0
    %1115 = vmatpush.bf16.msra.mxu0 %v574
    %1116 = vmatpush.bf16.msra.mxu0 %v573
    %1117 = vmatpush.bf16.msra.mxu0 %v572
    %1118 = vmatpush.bf16.msra.mxu0 %v571
    %1119 = vmatpush.bf16.msra.mxu0 %v570
    %1120 = vmatpush.bf16.msra.mxu0 %v569
    %1121 = vmatpush.bf16.msra.mxu0 %v568
    %1122 = vmatpush.bf16.msra.mxu0 %v567
    %1123 = vmatmul.bf16.gmra.mxu0 %v1095
    %v1124 = vpop.f32.mrf.mxu0
    %v1125 = vadd.f32 %v1112, %v1124
    %v1126 = vpop.f32.mrf.mxu0
    %1127 = vdwg.mxu0
    %1128 = vmatpush.bf16.msra.mxu0 %v582
    %1129 = vmatpush.bf16.msra.mxu0 %v581
    %1130 = vmatpush.bf16.msra.mxu0 %v580
    %1131 = vmatpush.bf16.msra.mxu0 %v579
    %1132 = vmatpush.bf16.msra.mxu0 %v578
    %1133 = vmatpush.bf16.msra.mxu0 %v577
    %1134 = vmatpush.bf16.msra.mxu0 %v576
    %1135 = vmatpush.bf16.msra.mxu0 %v575
    %1136 = vmatmul.bf16.gmra.mxu0 %v1096
    %v1137 = vpop.f32.mrf.mxu0
    %v1138 = vadd.f32 %v1125, %v1137
    %v1139 = vpop.f32.mrf.mxu0
    %1140 = vdwg.mxu0
    %1141 = vmatpush.bf16.msra.mxu0 %v590
    %1142 = vmatpush.bf16.msra.mxu0 %v589
    %1143 = vmatpush.bf16.msra.mxu0 %v588
    %1144 = vmatpush.bf16.msra.mxu0 %v587
    %1145 = vmatpush.bf16.msra.mxu0 %v586
    %1146 = vmatpush.bf16.msra.mxu0 %v585
    %1147 = vmatpush.bf16.msra.mxu0 %v584
    %1148 = vmatpush.bf16.msra.mxu0 %v583
    %1149 = vmatmul.bf16.gmra.mxu0 %v1097
    %v1150 = vpop.f32.mrf.mxu0
    %v1151 = vadd.f32 %v1138, %v1150
    %v1152 = vpop.f32.mrf.mxu0
    %1153 = vdwg.mxu0
    %1154 = vmatpush.bf16.msra.mxu0 %v598
    %1155 = vmatpush.bf16.msra.mxu0 %v597
    %1156 = vmatpush.bf16.msra.mxu0 %v596
    %1157 = vmatpush.bf16.msra.mxu0 %v595
    %1158 = vmatpush.bf16.msra.mxu0 %v594
    %1159 = vmatpush.bf16.msra.mxu0 %v593
    %1160 = vmatpush.bf16.msra.mxu0 %v592
    %1161 = vmatpush.bf16.msra.mxu0 %v591
    %1162 = vmatmul.bf16.gmra.mxu0 %v1098
    %v1163 = vpop.f32.mrf.mxu0
    %v1164 = vadd.f32 %v1151, %v1163
    %v1165 = vpop.f32.mrf.mxu0
    %1166 = vdwg.mxu0
    %1167 = vmatpush.bf16.msra.mxu0 %v606
    %1168 = vmatpush.bf16.msra.mxu0 %v605
    %1169 = vmatpush.bf16.msra.mxu0 %v604
    %1170 = vmatpush.bf16.msra.mxu0 %v603
    %1171 = vmatpush.bf16.msra.mxu0 %v602
    %1172 = vmatpush.bf16.msra.mxu0 %v601
    %1173 = vmatpush.bf16.msra.mxu0 %v600
    %1174 = vmatpush.bf16.msra.mxu0 %v599
    %1175 = vmatmul.bf16.gmra.mxu0 %v1099
    %v1176 = vpop.f32.mrf.mxu0
    %v1177 = vadd.f32 %v1164, %v1176
    %v1178 = vpop.f32.mrf.mxu0
    %1179 = vdwg.mxu0
    %1180 = vmatpush.bf16.msra.mxu0 %v614
    %1181 = vmatpush.bf16.msra.mxu0 %v613
    %1182 = vmatpush.bf16.msra.mxu0 %v612
    %1183 = vmatpush.bf16.msra.mxu0 %v611
    %1184 = vmatpush.bf16.msra.mxu0 %v610
    %1185 = vmatpush.bf16.msra.mxu0 %v609
    %1186 = vmatpush.bf16.msra.mxu0 %v608
    %1187 = vmatpush.bf16.msra.mxu0 %v607
    %1188 = vmatmul.bf16.gmra.mxu0 %v1100
    %v1189 = vpop.f32.mrf.mxu0
    %v1190 = vadd.f32 %v1177, %v1189
    %v1191 = vpop.f32.mrf.mxu0
    %1192 = vdwg.mxu0
    %1193 = vmatpush.bf16.msra.mxu0 %v622
    %1194 = vmatpush.bf16.msra.mxu0 %v621
    %1195 = vmatpush.bf16.msra.mxu0 %v620
    %1196 = vmatpush.bf16.msra.mxu0 %v619
    %1197 = vmatpush.bf16.msra.mxu0 %v618
    %1198 = vmatpush.bf16.msra.mxu0 %v617
    %1199 = vmatpush.bf16.msra.mxu0 %v616
    %1200 = vmatpush.bf16.msra.mxu0 %v615
    %1201 = vmatmul.bf16.gmra.mxu0 %v1101
    %v1202 = vpop.f32.mrf.mxu0
    %v1203 = vadd.f32 %v1190, %v1202
    %v1204 = vpop.f32.mrf.mxu0
    %1205 = vdwg.mxu0
    %v1206 = vpack.c.bf16 %v1203, %v1203
    %1207 = vmatpush.bf16.msra.mxu0 %v831
    %1208 = vmatpush.bf16.msra.mxu0 %v830
    %1209 = vmatpush.bf16.msra.mxu0 %v829
    %1210 = vmatpush.bf16.msra.mxu0 %v828
    %1211 = vmatpush.bf16.msra.mxu0 %v827
    %1212 = vmatpush.bf16.msra.mxu0 %v826
    %1213 = vmatpush.bf16.msra.mxu0 %v825
    %1214 = vmatpush.bf16.msra.mxu0 %v824
    %1215 = vmatmul.bf16.gmra.mxu0 %v1206
    %v1216 = vpop.f32.mrf.mxu0
    %v1217 = vadd.f32 0.0, %v1216
    %v1218 = vpop.f32.mrf.mxu0
    %1219 = vdwg.mxu0
    %v1220 = vrot.slane %v1217, 4
    %v1221 = vadd.f32 %v1217, %v1220
    %v1222 = vrot.slane %v1221, 2
    %v1223 = vadd.f32 %v1221, %v1222
    %v1224 = vrot.slane %v1223, 1
    %v1225 = vadd.f32 %v1223, %v1224
    %v1226 = vmul.f32 %v1225, %v865
    %v1227 = vsub.f32 %v1217, %v1226
    %v1228 = vmul.f32 %v1227, %v1227
    %v1229 = vrot.slane %v1228, 4
    %v1230 = vadd.f32 %v1228, %v1229
    %v1231 = vrot.slane %v1230, 2
    %v1232 = vadd.f32 %v1230, %v1231
    %v1233 = vrot.slane %v1232, 1
    %v1234 = vadd.f32 %v1232, %v1233
    %v1235 = vmul.f32 %v1234, %v865
    %v1236 = vadd.f32 %v1235, 1e-05
    %v1237 = vrsqrt.pop %v1236
    %v1238 = vmul.f32 %v1237, %v1236
    %v1239 = vmul.f32 %v1238, %v1237
    %v1240 = vmul.f32 0.5, %v1239
    %v1241 = vsub.f32 1.5, %v1240
    %v1242 = vmul.f32 %v1237, %v1241
    %vm1243 = vweird.f32 %v1236
    %vm1244 = vweird.f32 %v1237
    %vm1245 = vmor %vm1243, %vm1244
    %v1246 = vsel %vm1245, %v1237, %v1242
    %v1247 = vmul.f32 %v1227, %v1246
    %v1248 = vmul.f32 %v1247, %v889
    %v1249 = vadd.f32 %v1248, %v893
    %v1250 = vmax.f32 %v1249, 0.0
    %v1251 = vpack.c.bf16 %v1250, %v1250
    %1252 = vmatpush.bf16.msra.mxu0 %v937
    %1253 = vmatpush.bf16.msra.mxu0 %v936
    %1254 = vmatpush.bf16.msra.mxu0 %v935
    %1255 = vmatpush.bf16.msra.mxu0 %v934
    %1256 = vmatpush.bf16.msra.mxu0 %v933
    %1257 = vmatpush.bf16.msra.mxu0 %v932
    %1258 = vmatpush.bf16.msra.mxu0 %v931
    %1259 = vmatpush.bf16.msra.mxu0 %v930
    %1260 = vmatmul.bf16.gmra.mxu0 %v1251
    %v1261 = vpop.f32.mrf.mxu0
    %v1262 = vadd.f32 0.0, %v1261
    %v1263 = vpop.f32.mrf.mxu0
    %1264 = vdwg.mxu0
    %v1265 = vrot.slane %v1262, 4
    %v1266 = vadd.f32 %v1262, %v1265
    %v1267 = vrot.slane %v1266, 2
    %v1268 = vadd.f32 %v1266, %v1267
    %v1269 = vrot.slane %v1268, 1
    %v1270 = vadd.f32 %v1268, %v1269
    %v1271 = vmul.f32 %v1270, %v865
    %v1272 = vsub.f32 %v1262, %v1271
    %v1273 = vmul.f32 %v1272, %v1272
    %v1274 = vrot.slane %v1273, 4
    %v1275 = vadd.f32 %v1273, %v1274
    %v1276 = vrot.slane %v1275, 2
    %v1277 = vadd.f32 %v1275, %v1276
    %v1278 = vrot.slane %v1277, 1
    %v1279 = vadd.f32 %v1277, %v1278
    %v1280 = vmul.f32 %v1279, %v865
    %v1281 = vadd.f32 %v1280, 1e-05
    %v1282 = vrsqrt.pop %v1281
    %v1283 = vmul.f32 %v1282, %v1281
    %v1284 = vmul.f32 %v1283, %v1282
    %v1285 = vmul.f32 0.5, %v1284
    %v1286 = vsub.f32 1.5, %v1285
    %v1287 = vmul.f32 %v1282, %v1286
    %vm1288 = vweird.f32 %v1281
    %vm1289 = vweird.f32 %v1282
    %vm1290 = vmor %vm1288, %vm1289
    %v1291 = vsel %vm1290, %v1282, %v1287
    %v1292 = vmul.f32 %v1272, %v1291
    %v1293 = vmul.f32 %v1292, %v988
    %v1294 = vadd.f32 %v1293, %v992
    %v1295 = vmax.f32 %v1294, 0.0
    %v1296 = vpack.c.bf16 %v1295, %v1295
    %1297 = vmatpush.bf16.msra.mxu0 %v1036
    %1298 = vmatpush.bf16.msra.mxu0 %v1035
    %1299 = vmatpush.bf16.msra.mxu0 %v1034
    %1300 = vmatpush.bf16.msra.mxu0 %v1033
    %1301 = vmatpush.bf16.msra.mxu0 %v1032
    %1302 = vmatpush.bf16.msra.mxu0 %v1031
    %1303 = vmatpush.bf16.msra.mxu0 %v1030
    %1304 = vmatpush.bf16.msra.mxu0 %v1029
    %1305 = vmatmul.bf16.gmra.mxu0 %v1296
    %v1306 = vpop.f32.mrf.mxu0
    %v1307 = vadd.f32 0.0, %v1306
    %v1308 = vpop.f32.mrf.mxu0
    %1309 = vdwg.mxu0
    %v1310 = vrot.slane %v1307, 4
    %v1311 = vadd.f32 %v1307, %v1310
    %v1312 = vrot.slane %v1311, 2
    %v1313 = vadd.f32 %v1311, %v1312
    %v1314 = vrot.slane %v1313, 1
    %v1315 = vadd.f32 %v1313, %v1314
    %v1316 = vmul.f32 %v1315, %v865
    %v1317 = vsub.f32 %v1307, %v1316
    %v1318 = vmul.f32 %v1317, %v1317
    %v1319 = vrot.slane %v1318, 4
    %v1320 = vadd.f32 %v1318, %v1319
    %v1321 = vrot.slane %v1320, 2
    %v1322 = vadd.f32 %v1320, %v1321
    %v1323 = vrot.slane %v1322, 1
    %v1324 = vadd.f32 %v1322, %v1323
    %v1325 = vmul.f32 %v1324, %v865
    %v1326 = vadd.f32 %v1325, 1e-05
    %v1327 = vrsqrt.pop %v1326
    %v1328 = vmul.f32 %v1327, %v1326
    %v1329 = vmul.f32 %v1328, %v1327
    %v1330 = vmul.f32 0.5, %v1329
    %v1331 = vsub.f32 1.5, %v1330
    %v1332 = vmul.f32 %v1327, %v1331
    %vm1333 = vweird.f32 %v1326
    %vm1334 = vweird.f32 %v1327
    %vm1335 = vmor %vm1333, %vm1334
    %v1336 = vsel %vm1335, %v1327, %v1332
    %v1337 = vmul.f32 %v1317, %v1336
    %v1338 = vmul.f32 %v1085, 0.125
    %v1339 = vpack.c.bf16 %v1338, %v1338
    %v1340 = vpack.c.bf16 %v1337, %v1337
    %1341 = vxpose.xlu0.c.b16.start [1/8] %v1339, 128
    %1342 = vxpose.xlu0.c.b16.cont [2/8] 0, 128
    %1343 = vxpose.xlu0.c.b16.cont [3/8] 0, 128
    %1344 = vxpose.xlu0.c.b16.cont [4/8] 0, 128
    %1345 = vxpose.xlu0.c.b16.cont [5/8] 0, 128
    %1346 = vxpose.xlu0.c.b16.cont [6/8] 0, 128
    %1347 = vxpose.xlu0.c.b16.cont [7/8] 0, 128
    %1348 = vxpose.xlu0.c.b16.end [8/8] 0, 128
    %v1349 = vpop.trf.xlu0
    %v1350 = vpop.trf.xlu0
    %v1351 = vpop.trf.xlu0
    %v1352 = vpop.trf.xlu0
    %v1353 = vpop.trf.xlu0
    %v1354 = vpop.trf.xlu0
    %v1355 = vpop.trf.xlu0
    %v1356 = vpop.trf.xlu0
    %vm1357 = vcmask 64512
    %v1359 = vsel %vm1357, %v1349, 0
    %v1362 = vsel %vm1357, %v1350, 0
    %v1365 = vsel %vm1357, %v1351, 0
    %v1368 = vsel %vm1357, %v1352, 0
    %v1371 = vsel %vm1357, %v1353, 0
    %v1374 = vsel %vm1357, %v1354, 0
    %v1377 = vsel %vm1357, %v1355, 0
    %v1380 = vsel %vm1357, %v1356, 0
    %vm1382 = vcmask 1043456
    %v1384 = vsel %vm1382, %v1340, 0
    %1386 = vmatpush.bf16.msra.mxu0 0
    %1387 = vmatpush.bf16.msra.mxu0 0
    %1388 = vmatpush.bf16.msra.mxu0 0
    %1389 = vmatpush.bf16.msra.mxu0 0
    %1390 = vmatpush.bf16.msra.mxu0 0
    %1391 = vmatpush.bf16.msra.mxu0 0
    %1392 = vmatpush.bf16.msra.mxu0 0
    %1393 = vmatpush.bf16.msra.mxu0 %v1384
    %1394 = vmatmul.bf16.gmra.mxu0 %v1359
    %v1395 = vpop.f32.mrf.mxu0
    %v1396 = vadd.f32 0.0, %v1395
    %v1397 = vpop.f32.mrf.mxu0
    %v1398 = vadd.f32 0.0, %v1397
    %1399 = vmatmul.bf16.gmra.mxu0 %v1362
    %v1400 = vpop.f32.mrf.mxu0
    %v1401 = vadd.f32 0.0, %v1400
    %v1402 = vpop.f32.mrf.mxu0
    %v1403 = vadd.f32 0.0, %v1402
    %1404 = vmatmul.bf16.gmra.mxu0 %v1365
    %v1405 = vpop.f32.mrf.mxu0
    %v1406 = vadd.f32 0.0, %v1405
    %v1407 = vpop.f32.mrf.mxu0
    %v1408 = vadd.f32 0.0, %v1407
    %1409 = vmatmul.bf16.gmra.mxu0 %v1368
    %v1410 = vpop.f32.mrf.mxu0
    %v1411 = vadd.f32 0.0, %v1410
    %v1412 = vpop.f32.mrf.mxu0
    %v1413 = vadd.f32 0.0, %v1412
    %1414 = vmatmul.bf16.gmra.mxu0 %v1371
    %v1415 = vpop.f32.mrf.mxu0
    %v1416 = vadd.f32 0.0, %v1415
    %v1417 = vpop.f32.mrf.mxu0
    %v1418 = vadd.f32 0.0, %v1417
    %1419 = vmatmul.bf16.gmra.mxu0 %v1374
    %v1420 = vpop.f32.mrf.mxu0
    %v1421 = vadd.f32 0.0, %v1420
    %v1422 = vpop.f32.mrf.mxu0
    %v1423 = vadd.f32 0.0, %v1422
    %1424 = vmatmul.bf16.gmra.mxu0 %v1377
    %v1425 = vpop.f32.mrf.mxu0
    %v1426 = vadd.f32 0.0, %v1425
    %v1427 = vpop.f32.mrf.mxu0
    %v1428 = vadd.f32 0.0, %v1427
    %1429 = vmatmul.bf16.gmra.mxu0 %v1380
    %v1430 = vpop.f32.mrf.mxu0
    %v1431 = vadd.f32 0.0, %v1430
    %v1432 = vpop.f32.mrf.mxu0
    %v1433 = vadd.f32 0.0, %v1432
    %1434 = vdwg.mxu0
    %v1435 = vlaneseq
    %v1436 = vshrl.u32 %v1435, 7
    %v1437 = vadd.s32 %v1436, 8
    %v1438 = vadd.s32 %v1436, 16
    %v1439 = vadd.s32 %v1436, 24
    %v1440 = vadd.s32 %v1436, 32
    %v1441 = vadd.s32 %v1436, 40
    %v1442 = vadd.s32 %v1436, 48
    %v1443 = vadd.s32 %v1436, 56
    %v1444 = vadd.s32 %v1436, 64
    %v1445 = vadd.s32 %v1436, 72
    %v1446 = vadd.s32 %v1436, 80
    %v1447 = vadd.s32 %v1436, 88
    %v1448 = vadd.s32 %v1436, 96
    %v1449 = vadd.s32 %v1436, 104
    %v1450 = vadd.s32 %v1436, 112
    %v1451 = vadd.s32 %v1436, 120
    %v1452 = vlaneseq
    %v1453 = vand.u32 %v1452, 127
    %vm1454 = vcmp.eq.s32.totalorder %v1436, %v1453
    %vm1455 = vcmp.eq.s32.totalorder %v1437, %v1453
    %vm1456 = vcmp.eq.s32.totalorder %v1438, %v1453
    %vm1457 = vcmp.eq.s32.totalorder %v1439, %v1453
    %vm1458 = vcmp.eq.s32.totalorder %v1440, %v1453
    %vm1459 = vcmp.eq.s32.totalorder %v1441, %v1453
    %vm1460 = vcmp.eq.s32.totalorder %v1442, %v1453
    %vm1461 = vcmp.eq.s32.totalorder %v1443, %v1453
    %vm1462 = vcmp.eq.s32.totalorder %v1444, %v1453
    %vm1463 = vcmp.eq.s32.totalorder %v1445, %v1453
    %vm1464 = vcmp.eq.s32.totalorder %v1446, %v1453
    %vm1465 = vcmp.eq.s32.totalorder %v1447, %v1453
    %vm1466 = vcmp.eq.s32.totalorder %v1448, %v1453
    %vm1467 = vcmp.eq.s32.totalorder %v1449, %v1453
    %vm1468 = vcmp.eq.s32.totalorder %v1450, %v1453
    %vm1469 = vcmp.eq.s32.totalorder %v1451, %v1453
    %v1470 = vsel %vm1454, 1, 0
    %v1471 = vsel %vm1455, 1, 0
    %v1472 = vsel %vm1456, 1, 0
    %v1473 = vsel %vm1457, 1, 0
    %v1474 = vsel %vm1458, 1, 0
    %v1475 = vsel %vm1459, 1, 0
    %v1476 = vsel %vm1460, 1, 0
    %v1477 = vsel %vm1461, 1, 0
    %v1478 = vsel %vm1462, 1, 0
    %v1479 = vsel %vm1463, 1, 0
    %v1480 = vsel %vm1464, 1, 0
    %v1481 = vsel %vm1465, 1, 0
    %v1482 = vsel %vm1466, 1, 0
    %v1483 = vsel %vm1467, 1, 0
    %v1484 = vsel %vm1468, 1, 0
    %v1485 = vsel %vm1469, 1, 0
    %v1486 = vcvt.s32.f32 %v1470
    %v1487 = vcvt.s32.f32 %v1471
    %v1488 = vcvt.s32.f32 %v1472
    %v1489 = vcvt.s32.f32 %v1473
    %v1490 = vcvt.s32.f32 %v1474
    %v1491 = vcvt.s32.f32 %v1475
    %v1492 = vcvt.s32.f32 %v1476
    %v1493 = vcvt.s32.f32 %v1477
    %v1494 = vcvt.s32.f32 %v1478
    %v1495 = vcvt.s32.f32 %v1479
    %v1496 = vcvt.s32.f32 %v1480
    %v1497 = vcvt.s32.f32 %v1481
    %v1498 = vcvt.s32.f32 %v1482
    %v1499 = vcvt.s32.f32 %v1483
    %v1500 = vcvt.s32.f32 %v1484
    %v1501 = vcvt.s32.f32 %v1485
    %v1502 = vmul.f32 %v1396, %v1486
    %v1503 = vmul.f32 %v1398, %v1487
    %v1504 = vmul.f32 %v1401, %v1488
    %v1505 = vmul.f32 %v1403, %v1489
    %v1506 = vmul.f32 %v1406, %v1490
    %v1507 = vmul.f32 %v1408, %v1491
    %v1508 = vmul.f32 %v1411, %v1492
    %v1509 = vmul.f32 %v1413, %v1493
    %v1510 = vmul.f32 %v1416, %v1494
    %v1511 = vmul.f32 %v1418, %v1495
    %v1512 = vmul.f32 %v1421, %v1496
    %v1513 = vmul.f32 %v1423, %v1497
    %v1514 = vmul.f32 %v1426, %v1498
    %v1515 = vmul.f32 %v1428, %v1499
    %v1516 = vmul.f32 %v1431, %v1500
    %v1517 = vmul.f32 %v1433, %v1501
    %v1518 = vadd.f32 %v1502, %v1503
    %v1519 = vadd.f32 %v1518, %v1504
    %v1520 = vadd.f32 %v1519, %v1505
    %v1521 = vadd.f32 %v1520, %v1506
    %v1522 = vadd.f32 %v1521, %v1507
    %v1523 = vadd.f32 %v1522, %v1508
    %v1524 = vadd.f32 %v1523, %v1509
    %v1525 = vadd.f32 %v1524, %v1510
    %v1526 = vadd.f32 %v1525, %v1511
    %v1527 = vadd.f32 %v1526, %v1512
    %v1528 = vadd.f32 %v1527, %v1513
    %v1529 = vadd.f32 %v1528, %v1514
    %v1530 = vadd.f32 %v1529, %v1515
    %v1531 = vadd.f32 %v1530, %v1516
    %v1532 = vadd.f32 %v1531, %v1517
    %v1533 = vrot.slane %v1532, 4
    %v1534 = vadd.f32 %v1532, %v1533
    %v1535 = vrot.slane %v1534, 2
    %v1536 = vadd.f32 %v1534, %v1535
    %v1537 = vrot.slane %v1536, 1
    %v1538 = vadd.f32 %v1536, %v1537
    %v1539 = vmul.f32 %v1396, %v1396
    %v1540 = vmul.f32 %v1398, %v1398
    %v1541 = vmul.f32 %v1401, %v1401
    %v1542 = vmul.f32 %v1403, %v1403
    %v1543 = vmul.f32 %v1406, %v1406
    %v1544 = vmul.f32 %v1408, %v1408
    %v1545 = vmul.f32 %v1411, %v1411
    %v1546 = vmul.f32 %v1413, %v1413
    %v1547 = vmul.f32 %v1416, %v1416
    %v1548 = vmul.f32 %v1418, %v1418
    %v1549 = vmul.f32 %v1421, %v1421
    %v1550 = vmul.f32 %v1423, %v1423
    %v1551 = vmul.f32 %v1426, %v1426
    %v1552 = vmul.f32 %v1428, %v1428
    %v1553 = vmul.f32 %v1431, %v1431
    %v1554 = vmul.f32 %v1433, %v1433
    %v1555 = vadd.f32 %v1539, %v1540
    %v1556 = vadd.f32 %v1555, %v1541
    %v1557 = vadd.f32 %v1556, %v1542
    %v1558 = vadd.f32 %v1557, %v1543
    %v1559 = vadd.f32 %v1558, %v1544
    %v1560 = vadd.f32 %v1559, %v1545
    %v1561 = vadd.f32 %v1560, %v1546
    %v1562 = vadd.f32 %v1561, %v1547
    %v1563 = vadd.f32 %v1562, %v1548
    %v1564 = vadd.f32 %v1563, %v1549
    %v1565 = vadd.f32 %v1564, %v1550
    %v1566 = vadd.f32 %v1565, %v1551
    %v1567 = vadd.f32 %v1566, %v1552
    %v1568 = vadd.f32 %v1567, %v1553
    %v1569 = vadd.f32 %v1568, %v1554
    %1570 = vadd.xlane.f32.xlu0 %v1569
    %v1571 = vpop.xlane.xlu0 %1570
    %v1572 = vrot.slane %v1571, 4
    %v1573 = vadd.f32 %v1571, %v1572
    %v1574 = vrot.slane %v1573, 2
    %v1575 = vadd.f32 %v1573, %v1574
    %v1576 = vrot.slane %v1575, 1
    %v1577 = vadd.f32 %v1575, %v1576
    %s1578 = vtos %v1577
    %vm1579 = vcmask 1040384
    %v1580 = vsel %vm1579, %v1538, 0.0
    %1581 = vadd.xlane.f32.xlu0 %v1580
    %v1582 = vpop.xlane.xlu0 %1581
    %v1583 = vrot.slane %v1582, 4
    %v1584 = vadd.f32 %v1582, %v1583
    %v1585 = vrot.slane %v1584, 2
    %v1586 = vadd.f32 %v1584, %v1585
    %v1587 = vrot.slane %v1586, 1
    %v1588 = vadd.f32 %v1586, %v1587
    %s1589 = vtos %v1588
    %v1590 = vmul.f32 %v1538, %v1538
    %v1591 = vsel %vm1579, %v1590, 0.0
    %1592 = vadd.xlane.f32.xlu0 %v1591
    %v1593 = vpop.xlane.xlu0 %1592
    %v1594 = vrot.slane %v1593, 4
    %v1595 = vadd.f32 %v1593, %v1594
    %v1596 = vrot.slane %v1595, 2
    %v1597 = vadd.f32 %v1595, %v1596
    %v1598 = vrot.slane %v1597, 1
    %v1599 = vadd.f32 %v1597, %v1598
    %s1600 = vtos %v1599
    %s1601 = smul.f32 %s1589, 2.0
    %s1602 = ssub.f32 %s1600, %s1601
    %s1603 = sadd.f32 %s1602, 128.0
    %s1604 = ssub.f32 %s1578, %s1600
    %s1605 = smul.f32 %s1604, 0.0051
    %s1606 = sadd.f32 %s1603, %s1605
    %s1607 = scalar_lea.smem [#allocation11], 0
    %1608 = sst [smem:[%s1607]] %s1606
    // Predicated region
    $region62: #{barlow_twins_forward.1} parent=1 // pred_check
      _
    $region63: #{barlow_twins_forward.1} parent=1 // pred_check_branch
      %1610 = sbr.rel (0) target = $region65
    $region64: #{barlow_twins_forward.1} parent=1 // pred_region
      %1612 = vsyncadd [#allocation4], 0
      %s1614 = sshll.u32 %s10, 4
      %s1615 = int_to_ptr.hbm [resolvable:$true] %s1614
      %1617 = dma.smem_to_hbm [#allocation11], 16, %s1615, [#allocation4]
    $region65: #{barlow_twins_forward.1} parent=1 // pred_fallthru
      _
    // Predicated region
    $region66: #{barlow_twins_forward.1} parent=1 // pred_check
      _
    $region67: #{barlow_twins_forward.1} parent=1 // pred_check_branch
      %1619 = sbr.rel (0) target = $region69
    $region68: #{barlow_twins_forward.1} parent=1 // pred_region
      %1621 = dma.done [#allocation4], 16
    $region69: #{barlow_twins_forward.1} parent=1 // pred_fallthru
      _
    %1622 = sfence
    %1623 = vsyncpa [#allocation3], 1
    %1624 = vsyncpa [#allocation6], 1
    %1625 = vsyncpa [#allocation9], 1
    %1626 = vsyncpa [#allocation4], 1

</llo_original>
